<compile_context>
chip_gen: v5e
topology: v5e:2x2
jax: 0.10.0
libtpu: 0.0.40
codegen_flags: <defaults>
</compile_context>

<pallas_src>
import functools
import math

import jax
import jax.numpy as jnp
from jax import lax
from jax.experimental import pallas as pl
from jax.experimental.pallas import tpu as pltpu

C_IN_PAD = 8          # 3 RGB channels zero-padded to 8
C_FEAT = 128          # feature width (MXU-friendly contraction dim)
MAX_MATCHES = 5000
SAMPLE_THRESH = 0.8
MATCH_THRESH = 0.3
NEG_BIG = -1e30       # score bias for padded keys (avoid inf-inf NaNs)


def _tpu_config():
    """Per-generation tiling / precision policy."""
    try:
        kind = jax.devices()[0].device_kind.lower()
    except Exception:  # pragma: no cover
        kind = ""
    is_v7 = "v7" in kind
    bf16_eup = ("v6" in kind) or is_v7          # v5e has no bf16 EUP/VPU
    tq_pref = 512 if is_v7 else 1024            # v7x: 64 MiB VMEM/TC -> smaller q tile
    tk_pref = 2048
    vmem_limit = (48 if is_v7 else 96) * 1024 * 1024
    exp_dtype = jnp.bfloat16 if bf16_eup else jnp.float32
    return tq_pref, tk_pref, vmem_limit, exp_dtype


def _round_up(n, m):
    return ((n + m - 1) // m) * m


# ------------------------------ Pallas kernel ------------------------------ #

def _match_kernel(xa_ref, xb_ref, gb_ref, kb_ref, w1_ref, b1_ref, w2_ref, b2_ref,
                  out_ref, fa_sc, m_sc, acc_sc, *, w_b, h_b, exp_dtype):
    """Fused bf16 feature MLP + dense correlation + online softmax + pixel coords."""
    kv = pl.program_id(1)

    def mlp(x):  # bf16 in -> f32 out (bf16 MXU passes, f32 accumulation)
        h = jnp.dot(x, w1_ref[...], preferred_element_type=jnp.float32) + b1_ref[...]
        h = jnp.maximum(h, 0.0).astype(jnp.bfloat16)
        return jnp.dot(h, w2_ref[...], preferred_element_type=jnp.float32) + b2_ref[...]

    @pl.when(kv == 0)
    def _():
        # Fold 1/sqrt(C) into the cached (resident) query features.
        scale = 1.0 / math.sqrt(C_FEAT)
        fa_sc[...] = (mlp(xa_ref[...]) * scale).astype(jnp.bfloat16)
        m_sc[...] = jnp.full(m_sc.shape, -jnp.inf, dtype=m_sc.dtype)
        acc_sc[...] = jnp.zeros(acc_sc.shape, dtype=acc_sc.dtype)

    # Key-side MLP recompute is amortized by the large query tile (tq >= 512).
    # TODO(synk): precompute fb to HBM if a profile shows this MXU-bound on v7x.
    fb = mlp(xb_ref[...]).astype(jnp.bfloat16)                    # [TK, C]

    # s = fa @ fb^T without an explicit transpose: contract dim 1 of both operands.
    s = lax.dot_general(fa_sc[...], fb, (((1,), (1,)), ((), ())),
                        preferred_element_type=jnp.float32)       # [TQ, TK] f32
    s = s + kb_ref[...]                                           # mask padded keys

    m_prev = m_sc[...]
    m_new = jnp.maximum(m_prev, jnp.max(s, axis=-1, keepdims=True))
    alpha = jnp.exp(m_prev - m_new)                               # [TQ, 1] f32
    p = jnp.exp((s - m_new).astype(exp_dtype))                    # bf16 exp on v6e/v7x
    # gb columns are [gx_hi, gy_hi, 1, gx_lo, gy_lo, 0, 0, 0]: one bf16 MXU pass
    # accumulates the warp numerator (hi+lo limbs) and the softmax denominator l.
    acc_sc[...] = alpha * acc_sc[...] + jnp.dot(
        p.astype(jnp.bfloat16), gb_ref[...], preferred_element_type=jnp.float32)
    m_sc[...] = m_new

    @pl.when(kv == pl.num_programs(1) - 1)
    def _():
        acc = acc_sc[...]
        inv_l = 1.0 / acc[:, 2:3]                                 # exact; once per q tile
        warp_x = (acc[:, 0:1] + acc[:, 3:4]) * inv_l              # hi + lo limbs
        warp_y = (acc[:, 1:2] + acc[:, 4:5]) * inv_l
        cert = inv_l                                              # max softmax prob == 1/l
        # model.to_pixel_coordinates for image B (scalar constants only).
        kx1 = (warp_x + 1.0) * (0.5 * w_b)
        ky1 = (warp_y + 1.0) * (0.5 * h_b)
        col = lax.broadcasted_iota(jnp.int32, out_ref.shape, 1)   # no lane concatenate
        out_ref[...] = jnp.where(col == 0, kx1,
                       jnp.where(col == 1, ky1,
                       jnp.where(col == 2, cert, 0.0)))


# ------------------------------ pallas wrapper ------------------------------ #

def dense_match(xa, xb, gb, params, h_b, w_b, tile_q=None, tile_k=None):
    """One pallas_call: features + correlation + softmax warp + certainty + kpts1."""
    hw_a, hw_b = xa.shape[0], xb.shape[0]
    tq_pref, tk_pref, vmem_limit, exp_dtype = _tpu_config()
    tq = tile_q if tile_q is not None else tq_pref
    tk = tile_k if tile_k is not None else tk_pref
    tq = min(tq, _round_up(hw_a, 128))
    tk = min(tk, _round_up(hw_b, 128))

    # Pad both pixel axes up to a tile multiple (padded keys are masked via kb).
    hw_a_pad = _round_up(hw_a, tq)
    hw_b_pad = _round_up(hw_b, tk)
    xa_p = jnp.pad(xa, ((0, hw_a_pad - hw_a), (0, 0)))
    xb_p = jnp.pad(xb, ((0, hw_b_pad - hw_b), (0, 0)))
    gb_p = jnp.pad(gb, ((0, hw_b_pad - hw_b), (0, 0)))
    kb = jnp.where(jnp.arange(hw_b_pad) < hw_b, 0.0, NEG_BIG).astype(jnp.float32)[None, :]

    w1, b1, w2, b2 = params
    kern = functools.partial(_match_kernel, w_b=float(w_b), h_b=float(h_b),
                             exp_dtype=exp_dtype)
    packed = pl.pallas_call(
        kern,
        out_shape=jax.ShapeDtypeStruct((hw_a_pad, 8), jnp.float32),
        grid_spec=pltpu.PrefetchScalarGridSpec(
            num_scalar_prefetch=0,
            grid=(hw_a_pad // tq, hw_b_pad // tk),
            in_specs=[
                pl.BlockSpec((tq, C_IN_PAD), lambda qi, ki: (qi, 0)),   # image-A pixels (bf16)
                # TODO(synk): bump xb/gb to pipeline_mode=pl.Buffered(3) if the
                # k-side DMA shows up exposed in a profile at tk=2048.
                pl.BlockSpec((tk, C_IN_PAD), lambda qi, ki: (ki, 0)),   # image-B pixels (bf16)
                pl.BlockSpec((tk, 8), lambda qi, ki: (ki, 0)),          # [gx_hi,gy_hi,1,gx_lo,gy_lo,..]
                pl.BlockSpec((1, tk), lambda qi, ki: (0, ki)),          # padded-key bias row
                pl.BlockSpec((C_IN_PAD, C_FEAT), lambda qi, ki: (0, 0)),
                pl.BlockSpec((1, C_FEAT), lambda qi, ki: (0, 0)),
                pl.BlockSpec((C_FEAT, C_FEAT), lambda qi, ki: (0, 0)),
                pl.BlockSpec((1, C_FEAT), lambda qi, ki: (0, 0)),
            ],
            out_specs=pl.BlockSpec((tq, 8), lambda qi, ki: (qi, 0)),
            scratch_shapes=[
                pltpu.VMEM((tq, C_FEAT), jnp.bfloat16),   # cached scaled query features
                pltpu.VMEM((tq, 1), jnp.float32),         # running row max m
                pltpu.VMEM((tq, 8), jnp.float32),         # [warp_hi|l|warp_lo|pad] * l accumulator
            ],
        ),
        compiler_params=pltpu.CompilerParams(
            dimension_semantics=("parallel", "arbitrary"),
            vmem_limit_bytes=vmem_limit,
        ),
    )(xa_p, xb_p, gb_p, kb,
      w1.astype(jnp.bfloat16), b1.astype(jnp.float32),
      w2.astype(jnp.bfloat16), b2.astype(jnp.float32))
    return packed[:hw_a]


# ---------------------------------- glue ----------------------------------- #

def _normalized_grid(h, w):
    # Same pixel-center convention ROMA uses: linspace(-1 + 1/N, 1 - 1/N, N).
    xs = jnp.linspace(-1.0 + 1.0 / w, 1.0 - 1.0 / w, w, dtype=jnp.float32)
    ys = jnp.linspace(-1.0 + 1.0 / h, 1.0 - 1.0 / h, h, dtype=jnp.float32)
    gx, gy = jnp.meshgrid(xs, ys)                       # [h, w] each, (x, y) order
    return jnp.stack([gx, gy], axis=-1).reshape(h * w, 2)


def _pixels_major(img):
    # [3, H, W] -> [H*W, 8] bf16 (channels zero-padded onto the lane axis).
    # TODO(synk): at real resolutions fold this transpose/pad into the kernel's
    # BlockSpec (channel-major [3, HW] blocks) to avoid an extra HBM pass.
    c, h, w = img.shape
    x = img.reshape(c, h * w).T.astype(jnp.float32)
    x = jnp.pad(x, ((0, 0), (0, C_IN_PAD - c)))
    return x.astype(jnp.bfloat16)


def init_params(key):
    k1, k2, k3, k4 = jax.random.split(key, 4)
    w1 = jax.random.normal(k1, (C_IN_PAD, C_FEAT), jnp.float32) * 0.5
    b1 = jax.random.normal(k2, (1, C_FEAT), jnp.float32) * 0.1
    w2 = jax.random.normal(k3, (C_FEAT, C_FEAT), jnp.float32) / math.sqrt(C_FEAT)
    b2 = jax.random.normal(k4, (1, C_FEAT), jnp.float32) * 0.1
    return (w1, b1, w2, b2)


def roma_model_forward(data, params,
                       max_matches=MAX_MATCHES,
                       sample_thresh=SAMPLE_THRESH,
                       match_thresh=MATCH_THRESH,
                       tile_q=None, tile_k=None):
    img0 = data['image0_rgb'][0]   # [3, H_A, W_A]
    img1 = data['image1_rgb'][0]   # [3, H_B, W_B]
    H_A, W_A = img0.shape[-2:]
    H_B, W_B = img1.shape[-2:]

    # ----- model.match(img0, img1) -> warp (as pixel coords in B) + certainty -----
    xa = _pixels_major(img0)
    xb = _pixels_major(img1)
    grid_a = _normalized_grid(H_A, W_A)                      # [HW_A, 2]
    grid_b = _normalized_grid(H_B, W_B)                      # [HW_B, 2]
    hw_b = grid_b.shape[0]
    # Split grid-B coords into bf16 hi/lo limbs so the p@gb warp matmul stays a
    # single bf16 MXU pass without ~1px bf16 quantization at real resolutions.
    g_hi = grid_b.astype(jnp.bfloat16)
    g_lo = (grid_b - g_hi.astype(jnp.float32)).astype(jnp.bfloat16)
    gb = jnp.concatenate([
        g_hi,                                   # cols 0,1: gx_hi, gy_hi
        jnp.ones((hw_b, 1), jnp.bfloat16),      # col 2  : softmax denominator
        g_lo,                                   # cols 3,4: gx_lo, gy_lo
        jnp.zeros((hw_b, 3), jnp.bfloat16),     # cols 5-7: pad
    ], axis=-1)

    packed = dense_match(xa, xb, gb, params, H_B, W_B,
                         tile_q=tile_q, tile_k=tile_k)       # [HW_A, 8]
    kpts1_all = packed[:, 0:2]                               # pixel coords in image B
    certainty = packed[:, 2]                                 # [HW_A]

    # Pixel coords in image A come from the static grid (pure affine, plain jnp).
    kpts0_all = (grid_a + 1.0) * jnp.array([[0.5 * W_A, 0.5 * H_A]], jnp.float32)

    # ----- model.sample(warp, certainty, num=MAX_MATCHES) -----
    certainty = jnp.where(certainty > sample_thresh, 1.0, certainty)
    num = int(min(max_matches, kpts0_all.shape[0]))
    # TODO(synk): ROMA uses balanced multinomial sampling; deterministic top-k here.
    cert_sel, idx = lax.top_k(certainty, num)
    kpts0 = kpts0_all[idx]
    kpts1 = kpts1_all[idx]

    # ----- threshold mask (dynamic-shape boolean gather not expressible) -----
    mask = cert_sel > match_thresh
    # TODO(synk): emit fixed-size arrays with masked rows zeroed plus the mask itself.
    kpts0 = jnp.where(mask[:, None], kpts0, 0.0)
    kpts1 = jnp.where(mask[:, None], kpts1, 0.0)
    mconf = jnp.where(mask, cert_sel, 0.0)

    out = dict(data)
    out.update({
        'm_bids': jnp.zeros_like(kpts0[:, 0]),
        'mkpts0_f': kpts0,
        'mkpts1_f': kpts1,
        'mconf': mconf,
        'match_mask': mask,
    })
    return out


if __name__ == "__main__":
    key = jax.random.PRNGKey(0)
    kp, k0, k1 = jax.random.split(key, 3)
    params = init_params(kp)

    # Small shapes: HW_A = 256 (2 query tiles at tq=128); HW_B = 18*14 = 252,
    # which pads to 256 and exercises the padded-key mask plus the 2-step
    # online softmax.  Production defaults (tq=1024/512, tk=2048) kick in when
    # tile_q/tile_k are left as None.
    H_A, W_A = 16, 16
    H_B, W_B = 18, 14
    data = {
        'image0_rgb': jax.random.uniform(k0, (1, 3, H_A, W_A), dtype=jnp.float32),
        'image1_rgb': jax.random.uniform(k1, (1, 3, H_B, W_B), dtype=jnp.float32),
    }

    out = roma_model_forward(data, params, tile_q=128, tile_k=128)
    jax.block_until_ready(out['mkpts0_f'])
    jax.block_until_ready(out['mkpts1_f'])
    jax.block_until_ready(out['mconf'])
    print("KERNEL_OK")
</pallas_src>

<mosaic_0001>
module attributes {stable_mosaic.version = 11 : i64} {
  func.func @_match_kernel(%arg0: i32, %arg1: i32, %arg2: memref<128x8xbf16, #tpu.memory_space<vmem>>, %arg3: memref<128x8xbf16, #tpu.memory_space<vmem>>, %arg4: memref<128x8xbf16, #tpu.memory_space<vmem>>, %arg5: memref<1x128xf32, #tpu.memory_space<vmem>>, %arg6: memref<8x128xbf16, #tpu.memory_space<vmem>>, %arg7: memref<1x128xf32, #tpu.memory_space<vmem>>, %arg8: memref<128x128xbf16, #tpu.memory_space<vmem>>, %arg9: memref<1x128xf32, #tpu.memory_space<vmem>>, %arg10: memref<128x8xf32, #tpu.memory_space<vmem>>, %arg11: memref<128x128xbf16, #tpu.memory_space<vmem>>, %arg12: memref<128x1xf32, #tpu.memory_space<vmem>>, %arg13: memref<128x8xf32, #tpu.memory_space<vmem>>) attributes {dimension_semantics = [#tpu.dimension_semantics<parallel>, #tpu.dimension_semantics<arbitrary>], iteration_bounds = array<i64: 2, 2>, scalar_prefetch = 0 : i64, scratch_operands = 3 : i64, tpu.core_type = #tpu.core_type<tc>, window_params = [{transform_indices = @transform_0, window_bounds = array<i64: 128, 8>}, {transform_indices = @transform_1, window_bounds = array<i64: 128, 8>}, {transform_indices = @transform_2, window_bounds = array<i64: 128, 8>}, {transform_indices = @transform_3, window_bounds = array<i64: 1, 128>}, {pipeline_mode = #tpu.pipeline_mode<synchronous>, transform_indices = @transform_4, window_bounds = array<i64: 8, 128>}, {pipeline_mode = #tpu.pipeline_mode<synchronous>, transform_indices = @transform_5, window_bounds = array<i64: 1, 128>}, {pipeline_mode = #tpu.pipeline_mode<synchronous>, transform_indices = @transform_6, window_bounds = array<i64: 128, 128>}, {pipeline_mode = #tpu.pipeline_mode<synchronous>, transform_indices = @transform_7, window_bounds = array<i64: 1, 128>}, {transform_indices = @transform_8, window_bounds = array<i64: 128, 8>}]} {
    %c0_i32 = arith.constant 0 : i32
    %0 = arith.cmpi eq, %arg1, %c0_i32 : i32
    %1 = arith.extui %0 : i1 to i32
    %c0_i32_0 = arith.constant 0 : i32
    %2 = arith.cmpi ne, %1, %c0_i32_0 : i32
    scf.if %2 {
      %c0_30 = arith.constant 0 : index
      %c0_31 = arith.constant 0 : index
      %44 = vector.load %arg2[%c0_30, %c0_31] : memref<128x8xbf16, #tpu.memory_space<vmem>>, vector<128x8xbf16>
      %c0_32 = arith.constant 0 : index
      %c0_33 = arith.constant 0 : index
      %45 = vector.load %arg6[%c0_32, %c0_33] : memref<8x128xbf16, #tpu.memory_space<vmem>>, vector<8x128xbf16>
      %cst_34 = arith.constant dense<0.000000e+00> : vector<128x128xf32>
      %46 = tpu.matmul %44, %45, %cst_34 {dimension_numbers = #tpu.dot_dimension_numbers<[1], [0], [0], [1], [0, 0, 1, 1], [], []>} : vector<128x8xbf16>, vector<8x128xbf16>, vector<128x128xf32> -> vector<128x128xf32>
      %c0_35 = arith.constant 0 : index
      %c0_36 = arith.constant 0 : index
      %47 = vector.load %arg7[%c0_35, %c0_36] : memref<1x128xf32, #tpu.memory_space<vmem>>, vector<1x128xf32>
      %48 = vector.broadcast %47 : vector<1x128xf32> to vector<128x128xf32>
      %49 = arith.addf %46, %48 : vector<128x128xf32>
      %cst_37 = arith.constant 0.000000e+00 : f32
      %50 = vector.broadcast %cst_37 : f32 to vector<128x128xf32>
      %51 = arith.maximumf %49, %50 : vector<128x128xf32>
      %52 = arith.truncf %51 : vector<128x128xf32> to vector<128x128xbf16>
      %c0_38 = arith.constant 0 : index
      %c0_39 = arith.constant 0 : index
      %53 = vector.load %arg8[%c0_38, %c0_39] : memref<128x128xbf16, #tpu.memory_space<vmem>>, vector<128x128xbf16>
      %cst_40 = arith.constant dense<0.000000e+00> : vector<128x128xf32>
      %54 = tpu.matmul %52, %53, %cst_40 {dimension_numbers = #tpu.dot_dimension_numbers<[1], [0], [0], [1], [0, 0, 1, 1], [], []>} : vector<128x128xbf16>, vector<128x128xbf16>, vector<128x128xf32> -> vector<128x128xf32>
      %c0_41 = arith.constant 0 : index
      %c0_42 = arith.constant 0 : index
      %55 = vector.load %arg9[%c0_41, %c0_42] : memref<1x128xf32, #tpu.memory_space<vmem>>, vector<1x128xf32>
      %56 = vector.broadcast %55 : vector<1x128xf32> to vector<128x128xf32>
      %57 = arith.addf %54, %56 : vector<128x128xf32>
      %cst_43 = arith.constant 0.0883883461 : f32
      %58 = vector.broadcast %cst_43 : f32 to vector<128x128xf32>
      %59 = arith.mulf %57, %58 : vector<128x128xf32>
      %60 = arith.truncf %59 : vector<128x128xf32> to vector<128x128xbf16>
      %c0_44 = arith.constant 0 : index
      %c0_45 = arith.constant 0 : index
      %61 = vector.load %arg11[%c0_44, %c0_45] : memref<128x128xbf16, #tpu.memory_space<vmem>>, vector<128x128xbf16>
      tpu.vector_store %arg11[%c0_44, %c0_45], %60 {strides = array<i32>} : memref<128x128xbf16, #tpu.memory_space<vmem>>, vector<128x128xbf16>,
      %cst_46 = arith.constant 0xFF800000 : f32
      %62 = vector.broadcast %cst_46 : f32 to vector<128x1xf32>
      %c0_47 = arith.constant 0 : index
      %c0_48 = arith.constant 0 : index
      %63 = vector.load %arg12[%c0_47, %c0_48] : memref<128x1xf32, #tpu.memory_space<vmem>>, vector<128x1xf32>
      tpu.vector_store %arg12[%c0_47, %c0_48], %62 {strides = array<i32>} : memref<128x1xf32, #tpu.memory_space<vmem>>, vector<128x1xf32>,
      %cst_49 = arith.constant 0.000000e+00 : f32
      %64 = vector.broadcast %cst_49 : f32 to vector<128x8xf32>
      %c0_50 = arith.constant 0 : index
      %c0_51 = arith.constant 0 : index
      %65 = vector.load %arg13[%c0_50, %c0_51] : memref<128x8xf32, #tpu.memory_space<vmem>>, vector<128x8xf32>
      tpu.vector_store %arg13[%c0_50, %c0_51], %64 {strides = array<i32>} : memref<128x8xf32, #tpu.memory_space<vmem>>, vector<128x8xf32>,
    } else {
    }
    %c0 = arith.constant 0 : index
    %c0_1 = arith.constant 0 : index
    %3 = vector.load %arg3[%c0, %c0_1] : memref<128x8xbf16, #tpu.memory_space<vmem>>, vector<128x8xbf16>
    %c0_2 = arith.constant 0 : index
    %c0_3 = arith.constant 0 : index
    %4 = vector.load %arg6[%c0_2, %c0_3] : memref<8x128xbf16, #tpu.memory_space<vmem>>, vector<8x128xbf16>
    %cst = arith.constant dense<0.000000e+00> : vector<128x128xf32>
    %5 = tpu.matmul %3, %4, %cst {dimension_numbers = #tpu.dot_dimension_numbers<[1], [0], [0], [1], [0, 0, 1, 1], [], []>} : vector<128x8xbf16>, vector<8x128xbf16>, vector<128x128xf32> -> vector<128x128xf32>
    %c0_4 = arith.constant 0 : index
    %c0_5 = arith.constant 0 : index
    %6 = vector.load %arg7[%c0_4, %c0_5] : memref<1x128xf32, #tpu.memory_space<vmem>>, vector<1x128xf32>
    %7 = vector.broadcast %6 : vector<1x128xf32> to vector<128x128xf32>
    %8 = arith.addf %5, %7 : vector<128x128xf32>
    %cst_6 = arith.constant 0.000000e+00 : f32
    %9 = vector.broadcast %cst_6 : f32 to vector<128x128xf32>
    %10 = arith.maximumf %8, %9 : vector<128x128xf32>
    %11 = arith.truncf %10 : vector<128x128xf32> to vector<128x128xbf16>
    %c0_7 = arith.constant 0 : index
    %c0_8 = arith.constant 0 : index
    %12 = vector.load %arg8[%c0_7, %c0_8] : memref<128x128xbf16, #tpu.memory_space<vmem>>, vector<128x128xbf16>
    %cst_9 = arith.constant dense<0.000000e+00> : vector<128x128xf32>
    %13 = tpu.matmul %11, %12, %cst_9 {dimension_numbers = #tpu.dot_dimension_numbers<[1], [0], [0], [1], [0, 0, 1, 1], [], []>} : vector<128x128xbf16>, vector<128x128xbf16>, vector<128x128xf32> -> vector<128x128xf32>
    %c0_10 = arith.constant 0 : index
    %c0_11 = arith.constant 0 : index
    %14 = vector.load %arg9[%c0_10, %c0_11] : memref<1x128xf32, #tpu.memory_space<vmem>>, vector<1x128xf32>
    %15 = vector.broadcast %14 : vector<1x128xf32> to vector<128x128xf32>
    %16 = arith.addf %13, %15 : vector<128x128xf32>
    %17 = arith.truncf %16 : vector<128x128xf32> to vector<128x128xbf16>
    %c0_12 = arith.constant 0 : index
    %c0_13 = arith.constant 0 : index
    %18 = vector.load %arg11[%c0_12, %c0_13] : memref<128x128xbf16, #tpu.memory_space<vmem>>, vector<128x128xbf16>
    %cst_14 = arith.constant dense<0.000000e+00> : vector<128x128xf32>
    %19 = tpu.matmul %18, %17, %cst_14 {dimension_numbers = #tpu.dot_dimension_numbers<[1], [1], [0], [0], [0, 0, 1, 0], [], []>} : vector<128x128xbf16>, vector<128x128xbf16>, vector<128x128xf32> -> vector<128x128xf32>
    %c0_15 = arith.constant 0 : index
    %c0_16 = arith.constant 0 : index
    %20 = vector.load %arg5[%c0_15, %c0_16] : memref<1x128xf32, #tpu.memory_space<vmem>>, vector<1x128xf32>
    %21 = vector.broadcast %20 : vector<1x128xf32> to vector<128x128xf32>
    %22 = arith.addf %19, %21 : vector<128x128xf32>
    %c0_17 = arith.constant 0 : index
    %c0_18 = arith.constant 0 : index
    %23 = vector.load %arg12[%c0_17, %c0_18] : memref<128x1xf32, #tpu.memory_space<vmem>>, vector<128x1xf32>
    %cst_19 = arith.constant dense<0xFF800000> : vector<128xf32>
    %24 = vector.multi_reduction <maximumf>, %22, %cst_19 [1] : vector<128x128xf32> to vector<128xf32>
    %25 = vector.shape_cast %24 : vector<128xf32> to vector<128x1xf32>
    %26 = arith.maximumf %23, %25 : vector<128x1xf32>
    %27 = arith.subf %23, %26 : vector<128x1xf32>
    %28 = math.exp %27 : vector<128x1xf32>
    %29 = vector.broadcast %26 : vector<128x1xf32> to vector<128x128xf32>
    %30 = arith.subf %22, %29 : vector<128x128xf32>
    %31 = math.exp %30 : vector<128x128xf32>
    %c0_20 = arith.constant 0 : index
    %c0_21 = arith.constant 0 : index
    %32 = vector.load %arg13[%c0_20, %c0_21] : memref<128x8xf32, #tpu.memory_space<vmem>>, vector<128x8xf32>
    %33 = vector.broadcast %28 : vector<128x1xf32> to vector<128x8xf32>
    %34 = arith.mulf %33, %32 : vector<128x8xf32>
    %35 = arith.truncf %31 : vector<128x128xf32> to vector<128x128xbf16>
    %c0_22 = arith.constant 0 : index
    %c0_23 = arith.constant 0 : index
    %36 = vector.load %arg4[%c0_22, %c0_23] : memref<128x8xbf16, #tpu.memory_space<vmem>>, vector<128x8xbf16>
    %cst_24 = arith.constant dense<0.000000e+00> : vector<128x8xf32>
    %37 = tpu.matmul %35, %36, %cst_24 {dimension_numbers = #tpu.dot_dimension_numbers<[1], [0], [0], [1], [0, 0, 1, 1], [], []>} : vector<128x128xbf16>, vector<128x8xbf16>, vector<128x8xf32> -> vector<128x8xf32>
    %38 = arith.addf %34, %37 : vector<128x8xf32>
    %c0_25 = arith.constant 0 : index
    %c0_26 = arith.constant 0 : index
    %39 = vector.load %arg13[%c0_25, %c0_26] : memref<128x8xf32, #tpu.memory_space<vmem>>, vector<128x8xf32>
    tpu.vector_store %arg13[%c0_25, %c0_26], %38 {strides = array<i32>} : memref<128x8xf32, #tpu.memory_space<vmem>>, vector<128x8xf32>,
    %c0_27 = arith.constant 0 : index
    %c0_28 = arith.constant 0 : index
    %40 = vector.load %arg12[%c0_27, %c0_28] : memref<128x1xf32, #tpu.memory_space<vmem>>, vector<128x1xf32>
    tpu.vector_store %arg12[%c0_27, %c0_28], %26 {strides = array<i32>} : memref<128x1xf32, #tpu.memory_space<vmem>>, vector<128x1xf32>,
    %c1_i32 = arith.constant 1 : i32
    %41 = arith.cmpi eq, %arg1, %c1_i32 : i32
    %42 = arith.extui %41 : i1 to i32
    %c0_i32_29 = arith.constant 0 : i32
    %43 = arith.cmpi ne, %42, %c0_i32_29 : i32
    scf.if %43 {
      %c0_30 = arith.constant 0 : index
      %c0_31 = arith.constant 0 : index
      %44 = vector.load %arg13[%c0_30, %c0_31] : memref<128x8xf32, #tpu.memory_space<vmem>>, vector<128x8xf32>
      %45 = vector.extract_strided_slice %44 {offsets = [0, 2], sizes = [128, 1], strides = [1, 1]} : vector<128x8xf32> to vector<128x1xf32>
      %cst_32 = arith.constant 1.000000e+00 : f32
      %46 = vector.broadcast %cst_32 : f32 to vector<128x1xf32>
      %47 = arith.divf %46, %45 : vector<128x1xf32>
      %48 = vector.extract_strided_slice %44 {offsets = [0, 0], sizes = [128, 1], strides = [1, 1]} : vector<128x8xf32> to vector<128x1xf32>
      %49 = vector.extract_strided_slice %44 {offsets = [0, 3], sizes = [128, 1], strides = [1, 1]} : vector<128x8xf32> to vector<128x1xf32>
      %50 = arith.addf %48, %49 : vector<128x1xf32>
      %51 = arith.mulf %50, %47 : vector<128x1xf32>
      %52 = vector.extract_strided_slice %44 {offsets = [0, 1], sizes = [128, 1], strides = [1, 1]} : vector<128x8xf32> to vector<128x1xf32>
      %53 = vector.extract_strided_slice %44 {offsets = [0, 4], sizes = [128, 1], strides = [1, 1]} : vector<128x8xf32> to vector<128x1xf32>
      %54 = arith.addf %52, %53 : vector<128x1xf32>
      %55 = arith.mulf %54, %47 : vector<128x1xf32>
      %cst_33 = arith.constant 1.000000e+00 : f32
      %56 = vector.broadcast %cst_33 : f32 to vector<128x1xf32>
      %57 = arith.addf %51, %56 : vector<128x1xf32>
      %cst_34 = arith.constant 7.000000e+00 : f32
      %58 = vector.broadcast %cst_34 : f32 to vector<128x1xf32>
      %59 = arith.mulf %57, %58 : vector<128x1xf32>
      %cst_35 = arith.constant 1.000000e+00 : f32
      %60 = vector.broadcast %cst_35 : f32 to vector<128x1xf32>
      %61 = arith.addf %55, %60 : vector<128x1xf32>
      %cst_36 = arith.constant 9.000000e+00 : f32
      %62 = vector.broadcast %cst_36 : f32 to vector<128x1xf32>
      %63 = arith.mulf %61, %62 : vector<128x1xf32>
      %64 = tpu.iota {dimensions = array<i32: 1>} : vector<128x8xi32>
      %c0_i32_37 = arith.constant 0 : i32
      %65 = vector.broadcast %c0_i32_37 : i32 to vector<128x8xi32>
      %66 = arith.cmpi eq, %64, %65 : vector<128x8xi32>
      %c1_i32_38 = arith.constant 1 : i32
      %67 = vector.broadcast %c1_i32_38 : i32 to vector<128x8xi32>
      %68 = arith.cmpi eq, %64, %67 : vector<128x8xi32>
      %c2_i32 = arith.constant 2 : i32
      %69 = vector.broadcast %c2_i32 : i32 to vector<128x8xi32>
      %70 = arith.cmpi eq, %64, %69 : vector<128x8xi32>
      %cst_39 = arith.constant 0.000000e+00 : f32
      %71 = vector.shape_cast %47 : vector<128x1xf32> to vector<128x1xf32>
      %72 = vector.broadcast %71 : vector<128x1xf32> to vector<128x8xf32>
      %73 = vector.broadcast %cst_39 : f32 to vector<128x8xf32>
      %74 = arith.select %70, %72, %73 : vector<128x8xi1>, vector<128x8xf32>
      %75 = vector.shape_cast %63 : vector<128x1xf32> to vector<128x1xf32>
      %76 = vector.broadcast %75 : vector<128x1xf32> to vector<128x8xf32>
      %77 = arith.select %68, %76, %74 : vector<128x8xi1>, vector<128x8xf32>
      %78 = vector.shape_cast %59 : vector<128x1xf32> to vector<128x1xf32>
      %79 = vector.broadcast %78 : vector<128x1xf32> to vector<128x8xf32>
      %80 = arith.select %66, %79, %77 : vector<128x8xi1>, vector<128x8xf32>
      %c0_40 = arith.constant 0 : index
      %c0_41 = arith.constant 0 : index
      %81 = vector.load %arg10[%c0_40, %c0_41] : memref<128x8xf32, #tpu.memory_space<vmem>>, vector<128x8xf32>
      tpu.vector_store %arg10[%c0_40, %c0_41], %80 {strides = array<i32>} : memref<128x8xf32, #tpu.memory_space<vmem>>, vector<128x8xf32>,
    } else {
    }
    return
  }
  func.func @transform_0(%arg0: i32, %arg1: i32) -> (i32, i32) {
    %c0_i32 = arith.constant 0 : i32
    %c0_i32_0 = arith.constant 0 : i32
    return %arg0, %c0_i32 : i32, i32
  }
  func.func @transform_1(%arg0: i32, %arg1: i32) -> (i32, i32) {
    %c0_i32 = arith.constant 0 : i32
    %c0_i32_0 = arith.constant 0 : i32
    return %arg1, %c0_i32 : i32, i32
  }
  func.func @transform_2(%arg0: i32, %arg1: i32) -> (i32, i32) {
    %c0_i32 = arith.constant 0 : i32
    %c0_i32_0 = arith.constant 0 : i32
    return %arg1, %c0_i32 : i32, i32
  }
  func.func @transform_3(%arg0: i32, %arg1: i32) -> (i32, i32) {
    %c0_i32 = arith.constant 0 : i32
    %c0_i32_0 = arith.constant 0 : i32
    return %c0_i32, %arg1 : i32, i32
  }
  func.func @transform_4(%arg0: i32, %arg1: i32) -> (i32, i32) {
    %c0_i32 = arith.constant 0 : i32
    %c0_i32_0 = arith.constant 0 : i32
    %c0_i32_1 = arith.constant 0 : i32
    return %c0_i32, %c0_i32_0 : i32, i32
  }
  func.func @transform_5(%arg0: i32, %arg1: i32) -> (i32, i32) {
    %c0_i32 = arith.constant 0 : i32
    %c0_i32_0 = arith.constant 0 : i32
    %c0_i32_1 = arith.constant 0 : i32
    return %c0_i32, %c0_i32_0 : i32, i32
  }
  func.func @transform_6(%arg0: i32, %arg1: i32) -> (i32, i32) {
    %c0_i32 = arith.constant 0 : i32
    %c0_i32_0 = arith.constant 0 : i32
    %c0_i32_1 = arith.constant 0 : i32
    return %c0_i32, %c0_i32_0 : i32, i32
  }
  func.func @transform_7(%arg0: i32, %arg1: i32) -> (i32, i32) {
    %c0_i32 = arith.constant 0 : i32
    %c0_i32_0 = arith.constant 0 : i32
    %c0_i32_1 = arith.constant 0 : i32
    return %c0_i32, %c0_i32_0 : i32, i32
  }
  func.func @transform_8(%arg0: i32, %arg1: i32) -> (i32, i32) {
    %c0_i32 = arith.constant 0 : i32
    %c0_i32_0 = arith.constant 0 : i32
    return %arg0, %c0_i32 : i32, i32
  }
}

</mosaic_0001>

<llo_original>
// kernel: tpu_custom_call.1
$region0: #{tpu_custom_call.1}
  #allocation0 [shape = 'u32[]', space=smem, size = 0x4, offset = 0x4, fixed_abs, tag = 'smem constant byte address 0x4 - core index']
  #allocation1 [shape = 'u32[72,128]{1,0:T(1,128)}', space=vmem, size = 0x9000, scoped, tag = 'internal scratch']
  #allocation2 [shape = 'bf16[128,128]{1,0:T(8,128)(2,1)}', space=vmem, size = 0x8000, scoped, tag = 'scratch operand']
  #allocation3 [shape = 'f32[128,1]{1,0:T(8,128)}', space=vmem, size = 0x10000, scoped, tag = 'scratch operand']
  #allocation4 [shape = 'f32[128,8]{1,0:T(8,128)}', space=vmem, size = 0x10000, scoped, tag = 'scratch operand']
  %s0 = inlined_call_operand.vmem [shape: bf16[256,8], index: 0, kind: input, shape index: {}]
  %s1 = inlined_call_operand.vmem [shape: bf16[256,8], index: 1, kind: input, shape index: {}]
  %s2 = inlined_call_operand.vmem [shape: bf16[256,8], index: 2, kind: input, shape index: {}]
  %s3 = inlined_call_operand.vmem [shape: f32[1,256], index: 3, kind: input, shape index: {}]
  %s4 = inlined_call_operand.vmem [shape: bf16[8,128], index: 4, kind: input, shape index: {}]
  %s5 = inlined_call_operand.vmem [shape: f32[1,128], index: 5, kind: input, shape index: {}]
  %s6 = inlined_call_operand.vmem [shape: bf16[128,128], index: 6, kind: input, shape index: {}]
  %s7 = inlined_call_operand.vmem [shape: f32[1,128], index: 7, kind: input, shape index: {}]
  %s8 = inlined_call_operand.vmem [shape: f32[256,8], index: 8, kind: output, shape index: {}]
  %s9 = sld [smem:[#allocation0]]
  $region73: #{tpu_custom_call.1} parent=0
    _
  %s11 = ssub.s32 1, %s9
  %s12 = scalar_select 0, %s11, %s9
  loop: start=0, step=1, limit=6
  $region2: #{tpu_custom_call.1} parent=0 // loop_pre_header
    _
  $region3: #{tpu_custom_call.1} parent=0 // loop_header
    %s14 = sphi 0, %s18
    %p15 = scmp.ge.s32.totalorder %s14, 6
    %s21 = sphi 0, %s33
    %s22 = sphi 0, %s29
    %s23 = sphi 0, %s21
    %s24 = sphi 0, %s22
    %s25 = sphi 0, %s23
    %s26 = sphi 0, %s24
    %s36 = sphi 0, %s38
    %s39 = sphi 0, %s36
    %s40 = sphi 0, %s39
    %s56 = sphi 0, %s40
    %s62 = sphi 0, %s64
    %s65 = sphi 0, %s62
    %s66 = sphi 0, %s65
    %s82 = sphi 0, %s66
    %s88 = sphi 0, %s90
    %s91 = sphi 0, %s88
    %s92 = sphi 0, %s91
    %s108 = sphi 0, %s92
    %s114 = sphi 0, %s116
    %s117 = sphi 0, %s114
    %s118 = sphi 0, %s117
    %s134 = sphi 0, %s118
    %s138 = sphi 0, %s138
    %s140 = sphi 0, %s138
    %s141 = sphi 0, %s140
    %s155 = sphi 0, %s141
    %s159 = sphi 0, %s159
    %s161 = sphi 0, %s159
    %s162 = sphi 0, %s161
    %s176 = sphi 0, %s162
    %s180 = sphi 0, %s180
    %s182 = sphi 0, %s180
    %s183 = sphi 0, %s182
    %s197 = sphi 0, %s183
    %s201 = sphi 0, %s201
    %s203 = sphi 0, %s201
    %s204 = sphi 0, %s203
    %s218 = sphi 0, %s204
    %s224 = sphi 0, %s226
    %s227 = sphi 0, %s224
    %s228 = sphi 0, %s227
    %s244 = sphi 0, %s228
  $region4: #{tpu_custom_call.1} parent=0 // loop_header_branch
    %17 = sbr.rel (%p15) target = $region8
  $region5: #{tpu_custom_call.1} parent=0 // loop_body
    %s19 = ssub.s32 %s14, 1
    %s20 = ssub.s32 %s14, 2
    %s27 = sadd.s32 1, %s22
    %p28 = scmp.ge.s32.totalorder %s27, 2
    %s29 = scalar_select %p28, 0, %s27
    %s30 = sadd.s32 1, %s21
    %s31 = scalar_select %p28, %s30, %s21
    %p32 = scmp.ge.s32.totalorder %s31, 2
    %s33 = scalar_select %p32, 0, %s31
    %s34 = ssub.s32 %s21, %s33
    %p35 = scmp.eq.s32.totalorder %s34, 0
    %s37 = sadd.s32 %s36, 1
    %s38 = scalar_select %p35, %s36, %s37
    %p41 = pneg %p35
    %p42 = scmp.eq.s32.totalorder %s14, 3
    %p43 = por %p41, %p42
    %p44 = scmp.ne.s32.totalorder %s36, %s39
    %p45 = scmp.eq.s32.totalorder %s14, 0
    %p46 = por %p44, %p45
    %p47 = scmp.ne.s32.totalorder %s36, %s39
    %p48 = scmp.eq.s32.totalorder %s19, 3
    %p49 = por %p47, %p48
    %p50 = scmp.ne.s32.totalorder %s39, %s40
    %p51 = scmp.eq.s32.totalorder %s19, 0
    %p52 = por %p50, %p51
    %p53 = scmp.ne.s32.totalorder %s39, %s40
    %p54 = scmp.eq.s32.totalorder %s20, 3
    %p55 = por %p53, %p54
    %p57 = scmp.ne.s32.totalorder %s40, %s56
    %p58 = scmp.eq.s32.totalorder %s20, 0
    %p59 = por %p57, %p58
    %s60 = ssub.s32 %s22, %s29
    %p61 = scmp.eq.s32.totalorder %s60, 0
    %s63 = sadd.s32 %s62, 1
    %s64 = scalar_select %p61, %s62, %s63
    %p67 = pneg %p61
    %p68 = scmp.eq.s32.totalorder %s14, 3
    %p69 = por %p67, %p68
    %p70 = scmp.ne.s32.totalorder %s62, %s65
    %p71 = scmp.eq.s32.totalorder %s14, 0
    %p72 = por %p70, %p71
    %p73 = scmp.ne.s32.totalorder %s62, %s65
    %p74 = scmp.eq.s32.totalorder %s19, 3
    %p75 = por %p73, %p74
    %p76 = scmp.ne.s32.totalorder %s65, %s66
    %p77 = scmp.eq.s32.totalorder %s19, 0
    %p78 = por %p76, %p77
    %p79 = scmp.ne.s32.totalorder %s65, %s66
    %p80 = scmp.eq.s32.totalorder %s20, 3
    %p81 = por %p79, %p80
    %p83 = scmp.ne.s32.totalorder %s66, %s82
    %p84 = scmp.eq.s32.totalorder %s20, 0
    %p85 = por %p83, %p84
    %s86 = ssub.s32 %s22, %s29
    %p87 = scmp.eq.s32.totalorder %s86, 0
    %s89 = sadd.s32 %s88, 1
    %s90 = scalar_select %p87, %s88, %s89
    %p93 = pneg %p87
    %p94 = scmp.eq.s32.totalorder %s14, 3
    %p95 = por %p93, %p94
    %p96 = scmp.ne.s32.totalorder %s88, %s91
    %p97 = scmp.eq.s32.totalorder %s14, 0
    %p98 = por %p96, %p97
    %p99 = scmp.ne.s32.totalorder %s88, %s91
    %p100 = scmp.eq.s32.totalorder %s19, 3
    %p101 = por %p99, %p100
    %p102 = scmp.ne.s32.totalorder %s91, %s92
    %p103 = scmp.eq.s32.totalorder %s19, 0
    %p104 = por %p102, %p103
    %p105 = scmp.ne.s32.totalorder %s91, %s92
    %p106 = scmp.eq.s32.totalorder %s20, 3
    %p107 = por %p105, %p106
    %p109 = scmp.ne.s32.totalorder %s92, %s108
    %p110 = scmp.eq.s32.totalorder %s20, 0
    %p111 = por %p109, %p110
    %s112 = ssub.s32 %s22, %s29
    %p113 = scmp.eq.s32.totalorder %s112, 0
    %s115 = sadd.s32 %s114, 1
    %s116 = scalar_select %p113, %s114, %s115
    %p119 = pneg %p113
    %p120 = scmp.eq.s32.totalorder %s14, 3
    %p121 = por %p119, %p120
    %p122 = scmp.ne.s32.totalorder %s114, %s117
    %p123 = scmp.eq.s32.totalorder %s14, 0
    %p124 = por %p122, %p123
    %p125 = scmp.ne.s32.totalorder %s114, %s117
    %p126 = scmp.eq.s32.totalorder %s19, 3
    %p127 = por %p125, %p126
    %p128 = scmp.ne.s32.totalorder %s117, %s118
    %p129 = scmp.eq.s32.totalorder %s19, 0
    %p130 = por %p128, %p129
    %p131 = scmp.ne.s32.totalorder %s117, %s118
    %p132 = scmp.eq.s32.totalorder %s20, 3
    %p133 = por %p131, %p132
    %p135 = scmp.ne.s32.totalorder %s118, %s134
    %p136 = scmp.eq.s32.totalorder %s20, 0
    %p137 = por %p135, %p136
    %s139 = sadd.s32 %s138, 1
    %p142 = scmp.eq.s32.totalorder %s14, 3
    %p143 = scmp.ne.s32.totalorder %s138, %s140
    %p144 = scmp.eq.s32.totalorder %s14, 0
    %p145 = por %p143, %p144
    %p146 = scmp.ne.s32.totalorder %s138, %s140
    %p147 = scmp.eq.s32.totalorder %s19, 3
    %p148 = por %p146, %p147
    %p149 = scmp.ne.s32.totalorder %s140, %s141
    %p150 = scmp.eq.s32.totalorder %s19, 0
    %p151 = por %p149, %p150
    %p152 = scmp.ne.s32.totalorder %s140, %s141
    %p153 = scmp.eq.s32.totalorder %s20, 3
    %p154 = por %p152, %p153
    %p156 = scmp.ne.s32.totalorder %s141, %s155
    %p157 = scmp.eq.s32.totalorder %s20, 0
    %p158 = por %p156, %p157
    %s160 = sadd.s32 %s159, 1
    %p163 = scmp.eq.s32.totalorder %s14, 3
    %p164 = scmp.ne.s32.totalorder %s159, %s161
    %p165 = scmp.eq.s32.totalorder %s14, 0
    %p166 = por %p164, %p165
    %p167 = scmp.ne.s32.totalorder %s159, %s161
    %p168 = scmp.eq.s32.totalorder %s19, 3
    %p169 = por %p167, %p168
    %p170 = scmp.ne.s32.totalorder %s161, %s162
    %p171 = scmp.eq.s32.totalorder %s19, 0
    %p172 = por %p170, %p171
    %p173 = scmp.ne.s32.totalorder %s161, %s162
    %p174 = scmp.eq.s32.totalorder %s20, 3
    %p175 = por %p173, %p174
    %p177 = scmp.ne.s32.totalorder %s162, %s176
    %p178 = scmp.eq.s32.totalorder %s20, 0
    %p179 = por %p177, %p178
    %s181 = sadd.s32 %s180, 1
    %p184 = scmp.eq.s32.totalorder %s14, 3
    %p185 = scmp.ne.s32.totalorder %s180, %s182
    %p186 = scmp.eq.s32.totalorder %s14, 0
    %p187 = por %p185, %p186
    %p188 = scmp.ne.s32.totalorder %s180, %s182
    %p189 = scmp.eq.s32.totalorder %s19, 3
    %p190 = por %p188, %p189
    %p191 = scmp.ne.s32.totalorder %s182, %s183
    %p192 = scmp.eq.s32.totalorder %s19, 0
    %p193 = por %p191, %p192
    %p194 = scmp.ne.s32.totalorder %s182, %s183
    %p195 = scmp.eq.s32.totalorder %s20, 3
    %p196 = por %p194, %p195
    %p198 = scmp.ne.s32.totalorder %s183, %s197
    %p199 = scmp.eq.s32.totalorder %s20, 0
    %p200 = por %p198, %p199
    %s202 = sadd.s32 %s201, 1
    %p205 = scmp.eq.s32.totalorder %s14, 3
    %p206 = scmp.ne.s32.totalorder %s201, %s203
    %p207 = scmp.eq.s32.totalorder %s14, 0
    %p208 = por %p206, %p207
    %p209 = scmp.ne.s32.totalorder %s201, %s203
    %p210 = scmp.eq.s32.totalorder %s19, 3
    %p211 = por %p209, %p210
    %p212 = scmp.ne.s32.totalorder %s203, %s204
    %p213 = scmp.eq.s32.totalorder %s19, 0
    %p214 = por %p212, %p213
    %p215 = scmp.ne.s32.totalorder %s203, %s204
    %p216 = scmp.eq.s32.totalorder %s20, 3
    %p217 = por %p215, %p216
    %p219 = scmp.ne.s32.totalorder %s204, %s218
    %p220 = scmp.eq.s32.totalorder %s20, 0
    %p221 = por %p219, %p220
    %s222 = ssub.s32 %s21, %s33
    %p223 = scmp.eq.s32.totalorder %s222, 0
    %s225 = sadd.s32 %s224, 1
    %s226 = scalar_select %p223, %s224, %s225
    %p229 = pneg %p223
    %p230 = scmp.eq.s32.totalorder %s14, 3
    %p231 = por %p229, %p230
    %p232 = scmp.ne.s32.totalorder %s224, %s227
    %p233 = scmp.eq.s32.totalorder %s14, 0
    %p234 = por %p232, %p233
    %p235 = scmp.ne.s32.totalorder %s224, %s227
    %p236 = scmp.eq.s32.totalorder %s19, 3
    %p237 = por %p235, %p236
    %p238 = scmp.ne.s32.totalorder %s227, %s228
    %p239 = scmp.eq.s32.totalorder %s19, 0
    %p240 = por %p238, %p239
    %p241 = scmp.ne.s32.totalorder %s227, %s228
    %p242 = scmp.eq.s32.totalorder %s20, 3
    %p243 = por %p241, %p242
    %p245 = scmp.ne.s32.totalorder %s228, %s244
    %p246 = scmp.eq.s32.totalorder %s20, 0
    %p247 = por %p245, %p246
    %p248 = scmp.le.s32.totalorder 1, %s14
    %p249 = scmp.lt.s32.totalorder %s14, 5
    %p250 = pnand %p248, %p249
    %p251 = pneg %p250
    // Predicated region
    $region9: #{tpu_custom_call.1} parent=5 // pred_check
      _
    $region10: #{tpu_custom_call.1} parent=5 // pred_check_branch
      %253 = sbr.rel (%p250) target = $region12
    $region11: #{tpu_custom_call.1} parent=5 // pred_region
      %s254 = ssub.s32 %s14, 1
      // Predicated region
      $region13: #{tpu_custom_call.1} parent=11 // pred_check
        %p255 = pneg %p151
      $region14: #{tpu_custom_call.1} parent=11 // pred_check_branch
        %257 = sbr.rel (%p255) target = $region16
      $region15: #{tpu_custom_call.1} parent=11 // pred_region
        _
      $region16: #{tpu_custom_call.1} parent=11 // pred_fallthru
        _
      // Predicated region
      $region17: #{tpu_custom_call.1} parent=11 // pred_check
        %p258 = pneg %p172
      $region18: #{tpu_custom_call.1} parent=11 // pred_check_branch
        %260 = sbr.rel (%p258) target = $region20
      $region19: #{tpu_custom_call.1} parent=11 // pred_region
        _
      $region20: #{tpu_custom_call.1} parent=11 // pred_fallthru
        _
      // Predicated region
      $region21: #{tpu_custom_call.1} parent=11 // pred_check
        %p261 = pneg %p193
      $region22: #{tpu_custom_call.1} parent=11 // pred_check_branch
        %263 = sbr.rel (%p261) target = $region24
      $region23: #{tpu_custom_call.1} parent=11 // pred_region
        _
      $region24: #{tpu_custom_call.1} parent=11 // pred_fallthru
        _
      // Predicated region
      $region25: #{tpu_custom_call.1} parent=11 // pred_check
        %p264 = pneg %p214
      $region26: #{tpu_custom_call.1} parent=11 // pred_check_branch
        %266 = sbr.rel (%p264) target = $region28
      $region27: #{tpu_custom_call.1} parent=11 // pred_region
        _
      $region28: #{tpu_custom_call.1} parent=11 // pred_fallthru
        _
    $region12: #{tpu_custom_call.1} parent=5 // pred_fallthru
      _
    %p267 = scmp.lt.s32.totalorder %s14, 4
    // Predicated region
    $region29: #{tpu_custom_call.1} parent=5 // pred_check
      %p268 = pneg %p267
    $region30: #{tpu_custom_call.1} parent=5 // pred_check_branch
      %270 = sbr.rel (%p268) target = $region32
    $region31: #{tpu_custom_call.1} parent=5 // pred_region
      // Predicated region
      $region33: #{tpu_custom_call.1} parent=31 // pred_check
        %p271 = pneg %p46
      $region34: #{tpu_custom_call.1} parent=31 // pred_check_branch
        %273 = sbr.rel (%p271) target = $region36
      $region35: #{tpu_custom_call.1} parent=31 // pred_region
        %s274 = smul.u32 16, %s21
        %p275 = scmp.lt.s32.totalorder %s274, 31
        %s276 = scalar_select %p275, %s274, 31
        %s277 = smul.addr %s276, 4
        %s278 = scalar_lea.vmem %s0, %s277
        %s279 = smul.u32 16, %s21
      $region36: #{tpu_custom_call.1} parent=31 // pred_fallthru
        _
      // Predicated region
      $region37: #{tpu_custom_call.1} parent=31 // pred_check
        %p280 = pneg %p72
      $region38: #{tpu_custom_call.1} parent=31 // pred_check_branch
        %282 = sbr.rel (%p280) target = $region40
      $region39: #{tpu_custom_call.1} parent=31 // pred_region
        %s283 = smul.u32 16, %s22
        %p284 = scmp.lt.s32.totalorder %s283, 31
        %s285 = scalar_select %p284, %s283, 31
        %s286 = smul.addr %s285, 4
        %s287 = scalar_lea.vmem %s1, %s286
        %s288 = smul.u32 16, %s22
      $region40: #{tpu_custom_call.1} parent=31 // pred_fallthru
        _
      // Predicated region
      $region41: #{tpu_custom_call.1} parent=31 // pred_check
        %p289 = pneg %p98
      $region42: #{tpu_custom_call.1} parent=31 // pred_check_branch
        %291 = sbr.rel (%p289) target = $region44
      $region43: #{tpu_custom_call.1} parent=31 // pred_region
        %s292 = smul.u32 16, %s22
        %p293 = scmp.lt.s32.totalorder %s292, 31
        %s294 = scalar_select %p293, %s292, 31
        %s295 = smul.addr %s294, 4
        %s296 = scalar_lea.vmem %s2, %s295
        %s297 = smul.u32 16, %s22
      $region44: #{tpu_custom_call.1} parent=31 // pred_fallthru
        _
      // Predicated region
      $region45: #{tpu_custom_call.1} parent=31 // pred_check
        %p298 = pneg %p124
      $region46: #{tpu_custom_call.1} parent=31 // pred_check_branch
        %300 = sbr.rel (%p298) target = $region48
      $region47: #{tpu_custom_call.1} parent=31 // pred_region
        %p301 = scmp.lt.s32.totalorder %s22, 1
        %s302 = scalar_select %p301, %s22, 1
        %s303 = scalar_lea.vmem %s3, %s302
      $region48: #{tpu_custom_call.1} parent=31 // pred_fallthru
        _
    $region32: #{tpu_custom_call.1} parent=5 // pred_fallthru
      _
    %p304 = scmp.le.s32.totalorder 1, %s14
    %p305 = scmp.lt.s32.totalorder %s14, 5
    %p306 = pnand %p304, %p305
    %p307 = pneg %p306
    // Predicated region
    $region49: #{tpu_custom_call.1} parent=5 // pred_check
      _
    $region50: #{tpu_custom_call.1} parent=5 // pred_check_branch
      %309 = sbr.rel (%p306) target = $region52
    $region51: #{tpu_custom_call.1} parent=5 // pred_region
      %s310 = ssub.s32 %s14, 1
      %s311 = smul.u32 16, %s23
      %p312 = scmp.lt.s32.totalorder %s311, 31
      %s313 = scalar_select %p312, %s311, 31
      %s314 = smul.addr %s313, 4
      %s315 = scalar_lea.vmem %s0, %s314
      %p316 = pneg %p52
      %p317 = pneg %p49
      %s318 = smul.u32 16, %s24
      %p319 = scmp.lt.s32.totalorder %s318, 31
      %s320 = scalar_select %p319, %s318, 31
      %s321 = smul.addr %s320, 4
      %s322 = scalar_lea.vmem %s1, %s321
      %p323 = pneg %p78
      %p324 = pneg %p75
      %s325 = smul.u32 16, %s24
      %p326 = scmp.lt.s32.totalorder %s325, 31
      %s327 = scalar_select %p326, %s325, 31
      %s328 = smul.addr %s327, 4
      %s329 = scalar_lea.vmem %s2, %s328
      %p330 = pneg %p104
      %p331 = pneg %p101
      %p332 = scmp.lt.s32.totalorder %s24, 1
      %s333 = scalar_select %p332, %s24, 1
      %s334 = scalar_lea.vmem %s3, %s333
      %p335 = pneg %p130
      %p336 = pneg %p127
      %p337 = pneg %p151
      %p338 = pneg %p148
      %p339 = pneg %p172
      %p340 = pneg %p169
      %p341 = pneg %p193
      %p342 = pneg %p190
      %p343 = pneg %p214
      %p344 = pneg %p211
      %p345 = pneg %p240
      %p346 = pneg %p237
      %s347 = smul.u32 16, %s23
      %p348 = scmp.lt.s32.totalorder %s347, 31
      %s349 = scalar_select %p348, %s347, 31
      %s350 = smul.addr %s349, 8
      %s351 = scalar_lea.vmem %s8, %s350
      %s352 = smul.u32 16, %s23
      %p353 = scmp.lt.s32.totalorder %s352, 31
      %s354 = scalar_select %p353, %s352, 31
      %s355 = smul.addr %s354, 4
      %s356 = scalar_lea.vmem %s0, %s355
      %s357 = smul.u32 16, %s23
      %s358 = smul.u32 16, %s24
      %p359 = scmp.lt.s32.totalorder %s358, 31
      %s360 = scalar_select %p359, %s358, 31
      %s361 = smul.addr %s360, 4
      %s362 = scalar_lea.vmem %s1, %s361
      %s363 = smul.u32 16, %s24
      %s364 = smul.u32 16, %s24
      %p365 = scmp.lt.s32.totalorder %s364, 31
      %s366 = scalar_select %p365, %s364, 31
      %s367 = smul.addr %s366, 4
      %s368 = scalar_lea.vmem %s2, %s367
      %s369 = smul.u32 16, %s24
      %p370 = scmp.lt.s32.totalorder %s24, 1
      %s371 = scalar_select %p370, %s24, 1
      %s372 = scalar_lea.vmem %s3, %s371
      %s373 = smul.u32 16, %s23
      %p374 = scmp.lt.s32.totalorder %s373, 31
      %s375 = scalar_select %p374, %s373, 31
      %s376 = smul.addr %s375, 8
      %s377 = scalar_lea.vmem %s8, %s376
      %s378 = smul.u32 16, %s23
      %p380 = scmp.eq.s32.totalorder %s24, 0
      // Predicated region
      $region53: #{tpu_custom_call.1} parent=51 // pred_check
        %p381 = pneg %p380
      $region54: #{tpu_custom_call.1} parent=51 // pred_check_branch
        %383 = sbr.rel (%p381) target = $region56
      $region55: #{tpu_custom_call.1} parent=51 // pred_region
        %v384 = vld [vmem:[%s356] sm:$0xf]
        %v385 = vld [vmem:[%s356 + $0x4] sm:$0xf]
        %v386 = vld [vmem:[%s356 + $0x8] sm:$0xf]
        %v387 = vld [vmem:[%s356 + $0xc] sm:$0xf]
        %v388 = vld [vmem:[%s356 + $0x10] sm:$0xf]
        %v389 = vld [vmem:[%s356 + $0x14] sm:$0xf]
        %v390 = vld [vmem:[%s356 + $0x18] sm:$0xf]
        %v391 = vld [vmem:[%s356 + $0x1c] sm:$0xf]
        %v392 = vld [vmem:[%s356 + $0x20] sm:$0xf]
        %v393 = vld [vmem:[%s356 + $0x24] sm:$0xf]
        %v394 = vld [vmem:[%s356 + $0x28] sm:$0xf]
        %v395 = vld [vmem:[%s356 + $0x2c] sm:$0xf]
        %v396 = vld [vmem:[%s356 + $0x30] sm:$0xf]
        %v397 = vld [vmem:[%s356 + $0x34] sm:$0xf]
        %v398 = vld [vmem:[%s356 + $0x38] sm:$0xf]
        %v399 = vld [vmem:[%s356 + $0x3c] sm:$0xf]
        %v400 = vld [vmem:[%s4] sm:$0xf]
        %v401 = vld [vmem:[%s5] sm:$0x1]
        %v403 = vperm.slane %v401, 0
        %v421 = vunpack.c.l.b16 %v384
        %v422 = vunpack.c.l.b16 %v385
        %v423 = vunpack.c.l.b16 %v386
        %v424 = vunpack.c.l.b16 %v387
        %v425 = vunpack.c.l.b16 %v388
        %v426 = vunpack.c.l.b16 %v389
        %v427 = vunpack.c.l.b16 %v390
        %v428 = vunpack.c.l.b16 %v391
        %v429 = vunpack.c.l.b16 %v392
        %v430 = vunpack.c.l.b16 %v393
        %v431 = vunpack.c.l.b16 %v394
        %v432 = vunpack.c.l.b16 %v395
        %v433 = vunpack.c.l.b16 %v396
        %v434 = vunpack.c.l.b16 %v397
        %v435 = vunpack.c.l.b16 %v398
        %v436 = vunpack.c.l.b16 %v399
        %v437 = vpack.c.b16 %v422, %v421
        %v438 = vpack.c.b16 %v424, %v423
        %v439 = vpack.c.b16 %v426, %v425
        %v440 = vpack.c.b16 %v428, %v427
        %v441 = vpack.c.b16 %v430, %v429
        %v442 = vpack.c.b16 %v432, %v431
        %v443 = vpack.c.b16 %v434, %v433
        %v444 = vpack.c.b16 %v436, %v435
        %vm445 = vcmask 64512
        %v447 = vsel %vm445, %v437, 0
        %v450 = vsel %vm445, %v438, 0
        %v453 = vsel %vm445, %v439, 0
        %v456 = vsel %vm445, %v440, 0
        %v459 = vsel %vm445, %v441, 0
        %v462 = vsel %vm445, %v442, 0
        %v465 = vsel %vm445, %v443, 0
        %v468 = vsel %vm445, %v444, 0
        %vm470 = vcmask 1043456
        %v472 = vsel %vm470, %v400, 0
        %474 = vmatpush.bf16.msra.mxu0 0
        %475 = vmatpush.bf16.msra.mxu0 0
        %476 = vmatpush.bf16.msra.mxu0 0
        %477 = vmatpush.bf16.msra.mxu0 0
        %478 = vmatpush.bf16.msra.mxu0 0
        %479 = vmatpush.bf16.msra.mxu0 0
        %480 = vmatpush.bf16.msra.mxu0 0
        %481 = vmatpush.bf16.msra.mxu0 %v472
        %482 = vmatmul.bf16.gmra.mxu0 %v447
        %v483 = vpop.f32.mrf.mxu0
        %v484 = vadd.f32 %v403, %v483
        %v485 = vpop.f32.mrf.mxu0
        %v486 = vadd.f32 %v403, %v485
        %487 = vmatmul.bf16.gmra.mxu0 %v450
        %v488 = vpop.f32.mrf.mxu0
        %v489 = vadd.f32 %v403, %v488
        %v490 = vpop.f32.mrf.mxu0
        %v491 = vadd.f32 %v403, %v490
        %492 = vmatmul.bf16.gmra.mxu0 %v453
        %v493 = vpop.f32.mrf.mxu0
        %v494 = vadd.f32 %v403, %v493
        %v495 = vpop.f32.mrf.mxu0
        %v496 = vadd.f32 %v403, %v495
        %497 = vmatmul.bf16.gmra.mxu0 %v456
        %v498 = vpop.f32.mrf.mxu0
        %v499 = vadd.f32 %v403, %v498
        %v500 = vpop.f32.mrf.mxu0
        %v501 = vadd.f32 %v403, %v500
        %502 = vmatmul.bf16.gmra.mxu0 %v459
        %v503 = vpop.f32.mrf.mxu0
        %v504 = vadd.f32 %v403, %v503
        %v505 = vpop.f32.mrf.mxu0
        %v506 = vadd.f32 %v403, %v505
        %507 = vmatmul.bf16.gmra.mxu0 %v462
        %v508 = vpop.f32.mrf.mxu0
        %v509 = vadd.f32 %v403, %v508
        %v510 = vpop.f32.mrf.mxu0
        %v511 = vadd.f32 %v403, %v510
        %512 = vmatmul.bf16.gmra.mxu0 %v465
        %v513 = vpop.f32.mrf.mxu0
        %v514 = vadd.f32 %v403, %v513
        %v515 = vpop.f32.mrf.mxu0
        %v516 = vadd.f32 %v403, %v515
        %517 = vmatmul.bf16.gmra.mxu0 %v468
        %v518 = vpop.f32.mrf.mxu0
        %v519 = vadd.f32 %v403, %v518
        %v520 = vpop.f32.mrf.mxu0
        %v521 = vadd.f32 %v403, %v520
        %522 = vdwg.mxu0
        %v523 = vmax.f32 %v484, 0.0
        %v524 = vmax.f32 %v486, 0.0
        %v525 = vmax.f32 %v489, 0.0
        %v526 = vmax.f32 %v491, 0.0
        %v527 = vmax.f32 %v494, 0.0
        %v528 = vmax.f32 %v496, 0.0
        %v529 = vmax.f32 %v499, 0.0
        %v530 = vmax.f32 %v501, 0.0
        %v531 = vmax.f32 %v504, 0.0
        %v532 = vmax.f32 %v506, 0.0
        %v533 = vmax.f32 %v509, 0.0
        %v534 = vmax.f32 %v511, 0.0
        %v535 = vmax.f32 %v514, 0.0
        %v536 = vmax.f32 %v516, 0.0
        %v537 = vmax.f32 %v519, 0.0
        %v538 = vmax.f32 %v521, 0.0
        %v539 = vpack.c.bf16 %v524, %v523
        %v540 = vpack.c.bf16 %v526, %v525
        %v541 = vpack.c.bf16 %v528, %v527
        %v542 = vpack.c.bf16 %v530, %v529
        %v543 = vpack.c.bf16 %v532, %v531
        %v544 = vpack.c.bf16 %v534, %v533
        %v545 = vpack.c.bf16 %v536, %v535
        %v546 = vpack.c.bf16 %v538, %v537
        %v547 = vld [vmem:[%s6] sm:$0xf]
        %v548 = vld [vmem:[%s6 + $0x4] sm:$0xf]
        %v549 = vld [vmem:[%s6 + $0x8] sm:$0xf]
        %v550 = vld [vmem:[%s6 + $0xc] sm:$0xf]
        %v551 = vld [vmem:[%s6 + $0x10] sm:$0xf]
        %v552 = vld [vmem:[%s6 + $0x14] sm:$0xf]
        %v553 = vld [vmem:[%s6 + $0x18] sm:$0xf]
        %v554 = vld [vmem:[%s6 + $0x1c] sm:$0xf]
        %v555 = vld [vmem:[%s6 + $0x20] sm:$0xf]
        %v556 = vld [vmem:[%s6 + $0x24] sm:$0xf]
        %v557 = vld [vmem:[%s6 + $0x28] sm:$0xf]
        %v558 = vld [vmem:[%s6 + $0x2c] sm:$0xf]
        %v559 = vld [vmem:[%s6 + $0x30] sm:$0xf]
        %v560 = vld [vmem:[%s6 + $0x34] sm:$0xf]
        %v561 = vld [vmem:[%s6 + $0x38] sm:$0xf]
        %v562 = vld [vmem:[%s6 + $0x3c] sm:$0xf]
        %v563 = vld [vmem:[%s7] sm:$0x1]
        %v565 = vperm.slane %v563, 0
        %v583 = vunpack.c.l.b16 %v547
        %v584 = vunpack.c.l.b16 %v548
        %v585 = vunpack.c.l.b16 %v549
        %v586 = vunpack.c.l.b16 %v550
        %v587 = vunpack.c.l.b16 %v551
        %v588 = vunpack.c.l.b16 %v552
        %v589 = vunpack.c.l.b16 %v553
        %v590 = vunpack.c.l.b16 %v554
        %v591 = vunpack.c.l.b16 %v555
        %v592 = vunpack.c.l.b16 %v556
        %v593 = vunpack.c.l.b16 %v557
        %v594 = vunpack.c.l.b16 %v558
        %v595 = vunpack.c.l.b16 %v559
        %v596 = vunpack.c.l.b16 %v560
        %v597 = vunpack.c.l.b16 %v561
        %v598 = vunpack.c.l.b16 %v562
        %v599 = vpack.c.b16 %v584, %v583
        %v600 = vpack.c.b16 %v586, %v585
        %v601 = vpack.c.b16 %v588, %v587
        %v602 = vpack.c.b16 %v590, %v589
        %v603 = vpack.c.b16 %v592, %v591
        %v604 = vpack.c.b16 %v594, %v593
        %v605 = vpack.c.b16 %v596, %v595
        %v606 = vpack.c.b16 %v598, %v597
        %615 = vmatpush.bf16.msra.mxu0 %v606
        %616 = vmatpush.bf16.msra.mxu0 %v605
        %617 = vmatpush.bf16.msra.mxu0 %v604
        %618 = vmatpush.bf16.msra.mxu0 %v603
        %619 = vmatpush.bf16.msra.mxu0 %v602
        %620 = vmatpush.bf16.msra.mxu0 %v601
        %621 = vmatpush.bf16.msra.mxu0 %v600
        %622 = vmatpush.bf16.msra.mxu0 %v599
        %623 = vmatmul.bf16.gmra.mxu0 %v539
        %v624 = vpop.f32.mrf.mxu0
        %v625 = vadd.f32 %v565, %v624
        %v626 = vpop.f32.mrf.mxu0
        %v627 = vadd.f32 %v565, %v626
        %628 = vmatmul.bf16.gmra.mxu0 %v540
        %v629 = vpop.f32.mrf.mxu0
        %v630 = vadd.f32 %v565, %v629
        %v631 = vpop.f32.mrf.mxu0
        %v632 = vadd.f32 %v565, %v631
        %633 = vmatmul.bf16.gmra.mxu0 %v541
        %v634 = vpop.f32.mrf.mxu0
        %v635 = vadd.f32 %v565, %v634
        %v636 = vpop.f32.mrf.mxu0
        %v637 = vadd.f32 %v565, %v636
        %638 = vmatmul.bf16.gmra.mxu0 %v542
        %v639 = vpop.f32.mrf.mxu0
        %v640 = vadd.f32 %v565, %v639
        %v641 = vpop.f32.mrf.mxu0
        %v642 = vadd.f32 %v565, %v641
        %643 = vmatmul.bf16.gmra.mxu0 %v543
        %v644 = vpop.f32.mrf.mxu0
        %v645 = vadd.f32 %v565, %v644
        %v646 = vpop.f32.mrf.mxu0
        %v647 = vadd.f32 %v565, %v646
        %648 = vmatmul.bf16.gmra.mxu0 %v544
        %v649 = vpop.f32.mrf.mxu0
        %v650 = vadd.f32 %v565, %v649
        %v651 = vpop.f32.mrf.mxu0
        %v652 = vadd.f32 %v565, %v651
        %653 = vmatmul.bf16.gmra.mxu0 %v545
        %v654 = vpop.f32.mrf.mxu0
        %v655 = vadd.f32 %v565, %v654
        %v656 = vpop.f32.mrf.mxu0
        %v657 = vadd.f32 %v565, %v656
        %658 = vmatmul.bf16.gmra.mxu0 %v546
        %v659 = vpop.f32.mrf.mxu0
        %v660 = vadd.f32 %v565, %v659
        %v661 = vpop.f32.mrf.mxu0
        %v662 = vadd.f32 %v565, %v661
        %663 = vdwg.mxu0
        %v664 = vmul.f32 %v625, 0.088388346
        %v665 = vmul.f32 %v627, 0.088388346
        %v666 = vmul.f32 %v630, 0.088388346
        %v667 = vmul.f32 %v632, 0.088388346
        %v668 = vmul.f32 %v635, 0.088388346
        %v669 = vmul.f32 %v637, 0.088388346
        %v670 = vmul.f32 %v640, 0.088388346
        %v671 = vmul.f32 %v642, 0.088388346
        %v672 = vmul.f32 %v645, 0.088388346
        %v673 = vmul.f32 %v647, 0.088388346
        %v674 = vmul.f32 %v650, 0.088388346
        %v675 = vmul.f32 %v652, 0.088388346
        %v676 = vmul.f32 %v655, 0.088388346
        %v677 = vmul.f32 %v657, 0.088388346
        %v678 = vmul.f32 %v660, 0.088388346
        %v679 = vmul.f32 %v662, 0.088388346
        %v680 = vpack.c.bf16 %v664, %v664
        %v681 = vpack.c.bf16 %v665, %v665
        %v682 = vpack.c.bf16 %v666, %v666
        %v683 = vpack.c.bf16 %v667, %v667
        %v684 = vpack.c.bf16 %v668, %v668
        %v685 = vpack.c.bf16 %v669, %v669
        %v686 = vpack.c.bf16 %v670, %v670
        %v687 = vpack.c.bf16 %v671, %v671
        %v688 = vpack.c.bf16 %v672, %v672
        %v689 = vpack.c.bf16 %v673, %v673
        %v690 = vpack.c.bf16 %v674, %v674
        %v691 = vpack.c.bf16 %v675, %v675
        %v692 = vpack.c.bf16 %v676, %v676
        %v693 = vpack.c.bf16 %v677, %v677
        %v694 = vpack.c.bf16 %v678, %v678
        %v695 = vpack.c.bf16 %v679, %v679
        %696 = vst [vmem:[#allocation2] sm:$0xf] %v680
        %697 = vst [vmem:[#allocation2 + $0x4] sm:$0xf] %v681
        %698 = vst [vmem:[#allocation2 + $0x8] sm:$0xf] %v682
        %699 = vst [vmem:[#allocation2 + $0xc] sm:$0xf] %v683
        %700 = vst [vmem:[#allocation2 + $0x10] sm:$0xf] %v684
        %701 = vst [vmem:[#allocation2 + $0x14] sm:$0xf] %v685
        %702 = vst [vmem:[#allocation2 + $0x18] sm:$0xf] %v686
        %703 = vst [vmem:[#allocation2 + $0x1c] sm:$0xf] %v687
        %704 = vst [vmem:[#allocation2 + $0x20] sm:$0xf] %v688
        %705 = vst [vmem:[#allocation2 + $0x24] sm:$0xf] %v689
        %706 = vst [vmem:[#allocation2 + $0x28] sm:$0xf] %v690
        %707 = vst [vmem:[#allocation2 + $0x2c] sm:$0xf] %v691
        %708 = vst [vmem:[#allocation2 + $0x30] sm:$0xf] %v692
        %709 = vst [vmem:[#allocation2 + $0x34] sm:$0xf] %v693
        %710 = vst [vmem:[#allocation2 + $0x38] sm:$0xf] %v694
        %711 = vst [vmem:[#allocation2 + $0x3c] sm:$0xf] %v695
        %vm712 = vcmask 7168
        %713 = vst.msk [vmem:[#allocation3] sm:$0xff] %vm712, -inf
        %714 = vst.msk [vmem:[#allocation3 + $0x8] sm:$0xff] %vm712, -inf
        %715 = vst.msk [vmem:[#allocation3 + $0x10] sm:$0xff] %vm712, -inf
        %716 = vst.msk [vmem:[#allocation3 + $0x18] sm:$0xff] %vm712, -inf
        %717 = vst.msk [vmem:[#allocation3 + $0x20] sm:$0xff] %vm712, -inf
        %718 = vst.msk [vmem:[#allocation3 + $0x28] sm:$0xff] %vm712, -inf
        %719 = vst.msk [vmem:[#allocation3 + $0x30] sm:$0xff] %vm712, -inf
        %720 = vst.msk [vmem:[#allocation3 + $0x38] sm:$0xff] %vm712, -inf
        %721 = vst.msk [vmem:[#allocation3 + $0x40] sm:$0xff] %vm712, -inf
        %722 = vst.msk [vmem:[#allocation3 + $0x48] sm:$0xff] %vm712, -inf
        %723 = vst.msk [vmem:[#allocation3 + $0x50] sm:$0xff] %vm712, -inf
        %724 = vst.msk [vmem:[#allocation3 + $0x58] sm:$0xff] %vm712, -inf
        %725 = vst.msk [vmem:[#allocation3 + $0x60] sm:$0xff] %vm712, -inf
        %726 = vst.msk [vmem:[#allocation3 + $0x68] sm:$0xff] %vm712, -inf
        %727 = vst.msk [vmem:[#allocation3 + $0x70] sm:$0xff] %vm712, -inf
        %728 = vst.msk [vmem:[#allocation3 + $0x78] sm:$0xff] %vm712, -inf
        %729 = vst.msk [vmem:[#allocation4] sm:$0xff] %vm445, 0.0
        %730 = vst.msk [vmem:[#allocation4 + $0x8] sm:$0xff] %vm445, 0.0
        %731 = vst.msk [vmem:[#allocation4 + $0x10] sm:$0xff] %vm445, 0.0
        %732 = vst.msk [vmem:[#allocation4 + $0x18] sm:$0xff] %vm445, 0.0
        %733 = vst.msk [vmem:[#allocation4 + $0x20] sm:$0xff] %vm445, 0.0
        %734 = vst.msk [vmem:[#allocation4 + $0x28] sm:$0xff] %vm445, 0.0
        %735 = vst.msk [vmem:[#allocation4 + $0x30] sm:$0xff] %vm445, 0.0
        %736 = vst.msk [vmem:[#allocation4 + $0x38] sm:$0xff] %vm445, 0.0
        %737 = vst.msk [vmem:[#allocation4 + $0x40] sm:$0xff] %vm445, 0.0
        %738 = vst.msk [vmem:[#allocation4 + $0x48] sm:$0xff] %vm445, 0.0
        %739 = vst.msk [vmem:[#allocation4 + $0x50] sm:$0xff] %vm445, 0.0
        %740 = vst.msk [vmem:[#allocation4 + $0x58] sm:$0xff] %vm445, 0.0
        %741 = vst.msk [vmem:[#allocation4 + $0x60] sm:$0xff] %vm445, 0.0
        %742 = vst.msk [vmem:[#allocation4 + $0x68] sm:$0xff] %vm445, 0.0
        %743 = vst.msk [vmem:[#allocation4 + $0x70] sm:$0xff] %vm445, 0.0
        %744 = vst.msk [vmem:[#allocation4 + $0x78] sm:$0xff] %vm445, 0.0
      $region56: #{tpu_custom_call.1} parent=51 // pred_fallthru
        _
      %v745 = vld [vmem:[%s362] sm:$0xf]
      %v746 = vld [vmem:[%s362 + $0x4] sm:$0xf]
      %v747 = vld [vmem:[%s362 + $0x8] sm:$0xf]
      %v748 = vld [vmem:[%s362 + $0xc] sm:$0xf]
      %v749 = vld [vmem:[%s362 + $0x10] sm:$0xf]
      %v750 = vld [vmem:[%s362 + $0x14] sm:$0xf]
      %v751 = vld [vmem:[%s362 + $0x18] sm:$0xf]
      %v752 = vld [vmem:[%s362 + $0x1c] sm:$0xf]
      %v753 = vld [vmem:[%s362 + $0x20] sm:$0xf]
      %v754 = vld [vmem:[%s362 + $0x24] sm:$0xf]
      %v755 = vld [vmem:[%s362 + $0x28] sm:$0xf]
      %v756 = vld [vmem:[%s362 + $0x2c] sm:$0xf]
      %v757 = vld [vmem:[%s362 + $0x30] sm:$0xf]
      %v758 = vld [vmem:[%s362 + $0x34] sm:$0xf]
      %v759 = vld [vmem:[%s362 + $0x38] sm:$0xf]
      %v760 = vld [vmem:[%s362 + $0x3c] sm:$0xf]
      %v761 = vld [vmem:[%s4] sm:$0xf]
      %v762 = vld [vmem:[%s5] sm:$0x1]
      %v764 = vperm.slane %v762, 0
      %v782 = vunpack.c.l.b16 %v745
      %v783 = vunpack.c.l.b16 %v746
      %v784 = vunpack.c.l.b16 %v747
      %v785 = vunpack.c.l.b16 %v748
      %v786 = vunpack.c.l.b16 %v749
      %v787 = vunpack.c.l.b16 %v750
      %v788 = vunpack.c.l.b16 %v751
      %v789 = vunpack.c.l.b16 %v752
      %v790 = vunpack.c.l.b16 %v753
      %v791 = vunpack.c.l.b16 %v754
      %v792 = vunpack.c.l.b16 %v755
      %v793 = vunpack.c.l.b16 %v756
      %v794 = vunpack.c.l.b16 %v757
      %v795 = vunpack.c.l.b16 %v758
      %v796 = vunpack.c.l.b16 %v759
      %v797 = vunpack.c.l.b16 %v760
      %v798 = vpack.c.b16 %v783, %v782
      %v799 = vpack.c.b16 %v785, %v784
      %v800 = vpack.c.b16 %v787, %v786
      %v801 = vpack.c.b16 %v789, %v788
      %v802 = vpack.c.b16 %v791, %v790
      %v803 = vpack.c.b16 %v793, %v792
      %v804 = vpack.c.b16 %v795, %v794
      %v805 = vpack.c.b16 %v797, %v796
      %vm806 = vcmask 64512
      %v808 = vsel %vm806, %v798, 0
      %v811 = vsel %vm806, %v799, 0
      %v814 = vsel %vm806, %v800, 0
      %v817 = vsel %vm806, %v801, 0
      %v820 = vsel %vm806, %v802, 0
      %v823 = vsel %vm806, %v803, 0
      %v826 = vsel %vm806, %v804, 0
      %v829 = vsel %vm806, %v805, 0
      %vm831 = vcmask 1043456
      %v833 = vsel %vm831, %v761, 0
      %835 = vmatpush.bf16.msra.mxu0 0
      %836 = vmatpush.bf16.msra.mxu0 0
      %837 = vmatpush.bf16.msra.mxu0 0
      %838 = vmatpush.bf16.msra.mxu0 0
      %839 = vmatpush.bf16.msra.mxu0 0
      %840 = vmatpush.bf16.msra.mxu0 0
      %841 = vmatpush.bf16.msra.mxu0 0
      %842 = vmatpush.bf16.msra.mxu0 %v833
      %843 = vmatmul.bf16.gmra.mxu0 %v808
      %v844 = vpop.f32.mrf.mxu0
      %v845 = vadd.f32 %v764, %v844
      %v846 = vpop.f32.mrf.mxu0
      %v847 = vadd.f32 %v764, %v846
      %848 = vmatmul.bf16.gmra.mxu0 %v811
      %v849 = vpop.f32.mrf.mxu0
      %v850 = vadd.f32 %v764, %v849
      %v851 = vpop.f32.mrf.mxu0
      %v852 = vadd.f32 %v764, %v851
      %853 = vmatmul.bf16.gmra.mxu0 %v814
      %v854 = vpop.f32.mrf.mxu0
      %v855 = vadd.f32 %v764, %v854
      %v856 = vpop.f32.mrf.mxu0
      %v857 = vadd.f32 %v764, %v856
      %858 = vmatmul.bf16.gmra.mxu0 %v817
      %v859 = vpop.f32.mrf.mxu0
      %v860 = vadd.f32 %v764, %v859
      %v861 = vpop.f32.mrf.mxu0
      %v862 = vadd.f32 %v764, %v861
      %863 = vmatmul.bf16.gmra.mxu0 %v820
      %v864 = vpop.f32.mrf.mxu0
      %v865 = vadd.f32 %v764, %v864
      %v866 = vpop.f32.mrf.mxu0
      %v867 = vadd.f32 %v764, %v866
      %868 = vmatmul.bf16.gmra.mxu0 %v823
      %v869 = vpop.f32.mrf.mxu0
      %v870 = vadd.f32 %v764, %v869
      %v871 = vpop.f32.mrf.mxu0
      %v872 = vadd.f32 %v764, %v871
      %873 = vmatmul.bf16.gmra.mxu0 %v826
      %v874 = vpop.f32.mrf.mxu0
      %v875 = vadd.f32 %v764, %v874
      %v876 = vpop.f32.mrf.mxu0
      %v877 = vadd.f32 %v764, %v876
      %878 = vmatmul.bf16.gmra.mxu0 %v829
      %v879 = vpop.f32.mrf.mxu0
      %v880 = vadd.f32 %v764, %v879
      %v881 = vpop.f32.mrf.mxu0
      %v882 = vadd.f32 %v764, %v881
      %883 = vdwg.mxu0
      %v884 = vmax.f32 %v845, 0.0
      %v885 = vmax.f32 %v847, 0.0
      %v886 = vmax.f32 %v850, 0.0
      %v887 = vmax.f32 %v852, 0.0
      %v888 = vmax.f32 %v855, 0.0
      %v889 = vmax.f32 %v857, 0.0
      %v890 = vmax.f32 %v860, 0.0
      %v891 = vmax.f32 %v862, 0.0
      %v892 = vmax.f32 %v865, 0.0
      %v893 = vmax.f32 %v867, 0.0
      %v894 = vmax.f32 %v870, 0.0
      %v895 = vmax.f32 %v872, 0.0
      %v896 = vmax.f32 %v875, 0.0
      %v897 = vmax.f32 %v877, 0.0
      %v898 = vmax.f32 %v880, 0.0
      %v899 = vmax.f32 %v882, 0.0
      %v900 = vpack.c.bf16 %v885, %v884
      %v901 = vpack.c.bf16 %v887, %v886
      %v902 = vpack.c.bf16 %v889, %v888
      %v903 = vpack.c.bf16 %v891, %v890
      %v904 = vpack.c.bf16 %v893, %v892
      %v905 = vpack.c.bf16 %v895, %v894
      %v906 = vpack.c.bf16 %v897, %v896
      %v907 = vpack.c.bf16 %v899, %v898
      %v908 = vld [vmem:[%s6] sm:$0xf]
      %v909 = vld [vmem:[%s6 + $0x4] sm:$0xf]
      %v910 = vld [vmem:[%s6 + $0x8] sm:$0xf]
      %v911 = vld [vmem:[%s6 + $0xc] sm:$0xf]
      %v912 = vld [vmem:[%s6 + $0x10] sm:$0xf]
      %v913 = vld [vmem:[%s6 + $0x14] sm:$0xf]
      %v914 = vld [vmem:[%s6 + $0x18] sm:$0xf]
      %v915 = vld [vmem:[%s6 + $0x1c] sm:$0xf]
      %v916 = vld [vmem:[%s6 + $0x20] sm:$0xf]
      %v917 = vld [vmem:[%s6 + $0x24] sm:$0xf]
      %v918 = vld [vmem:[%s6 + $0x28] sm:$0xf]
      %v919 = vld [vmem:[%s6 + $0x2c] sm:$0xf]
      %v920 = vld [vmem:[%s6 + $0x30] sm:$0xf]
      %v921 = vld [vmem:[%s6 + $0x34] sm:$0xf]
      %v922 = vld [vmem:[%s6 + $0x38] sm:$0xf]
      %v923 = vld [vmem:[%s6 + $0x3c] sm:$0xf]
      %v924 = vld [vmem:[%s7] sm:$0x1]
      %v926 = vperm.slane %v924, 0
      %v944 = vunpack.c.l.b16 %v908
      %v945 = vunpack.c.l.b16 %v909
      %v946 = vunpack.c.l.b16 %v910
      %v947 = vunpack.c.l.b16 %v911
      %v948 = vunpack.c.l.b16 %v912
      %v949 = vunpack.c.l.b16 %v913
      %v950 = vunpack.c.l.b16 %v914
      %v951 = vunpack.c.l.b16 %v915
      %v952 = vunpack.c.l.b16 %v916
      %v953 = vunpack.c.l.b16 %v917
      %v954 = vunpack.c.l.b16 %v918
      %v955 = vunpack.c.l.b16 %v919
      %v956 = vunpack.c.l.b16 %v920
      %v957 = vunpack.c.l.b16 %v921
      %v958 = vunpack.c.l.b16 %v922
      %v959 = vunpack.c.l.b16 %v923
      %v960 = vpack.c.b16 %v945, %v944
      %v961 = vpack.c.b16 %v947, %v946
      %v962 = vpack.c.b16 %v949, %v948
      %v963 = vpack.c.b16 %v951, %v950
      %v964 = vpack.c.b16 %v953, %v952
      %v965 = vpack.c.b16 %v955, %v954
      %v966 = vpack.c.b16 %v957, %v956
      %v967 = vpack.c.b16 %v959, %v958
      %976 = vmatpush.bf16.msra.mxu0 %v967
      %977 = vmatpush.bf16.msra.mxu0 %v966
      %978 = vmatpush.bf16.msra.mxu0 %v965
      %979 = vmatpush.bf16.msra.mxu0 %v964
      %980 = vmatpush.bf16.msra.mxu0 %v963
      %981 = vmatpush.bf16.msra.mxu0 %v962
      %982 = vmatpush.bf16.msra.mxu0 %v961
      %983 = vmatpush.bf16.msra.mxu0 %v960
      %984 = vmatmul.bf16.gmra.mxu0 %v900
      %v985 = vpop.f32.mrf.mxu0
      %v986 = vadd.f32 %v926, %v985
      %v987 = vpop.f32.mrf.mxu0
      %v988 = vadd.f32 %v926, %v987
      %989 = vmatmul.bf16.gmra.mxu0 %v901
      %v990 = vpop.f32.mrf.mxu0
      %v991 = vadd.f32 %v926, %v990
      %v992 = vpop.f32.mrf.mxu0
      %v993 = vadd.f32 %v926, %v992
      %994 = vmatmul.bf16.gmra.mxu0 %v902
      %v995 = vpop.f32.mrf.mxu0
      %v996 = vadd.f32 %v926, %v995
      %v997 = vpop.f32.mrf.mxu0
      %v998 = vadd.f32 %v926, %v997
      %999 = vmatmul.bf16.gmra.mxu0 %v903
      %v1000 = vpop.f32.mrf.mxu0
      %v1001 = vadd.f32 %v926, %v1000
      %v1002 = vpop.f32.mrf.mxu0
      %v1003 = vadd.f32 %v926, %v1002
      %1004 = vmatmul.bf16.gmra.mxu0 %v904
      %v1005 = vpop.f32.mrf.mxu0
      %v1006 = vadd.f32 %v926, %v1005
      %v1007 = vpop.f32.mrf.mxu0
      %v1008 = vadd.f32 %v926, %v1007
      %1009 = vmatmul.bf16.gmra.mxu0 %v905
      %v1010 = vpop.f32.mrf.mxu0
      %v1011 = vadd.f32 %v926, %v1010
      %v1012 = vpop.f32.mrf.mxu0
      %v1013 = vadd.f32 %v926, %v1012
      %1014 = vmatmul.bf16.gmra.mxu0 %v906
      %v1015 = vpop.f32.mrf.mxu0
      %v1016 = vadd.f32 %v926, %v1015
      %v1017 = vpop.f32.mrf.mxu0
      %v1018 = vadd.f32 %v926, %v1017
      %1019 = vmatmul.bf16.gmra.mxu0 %v907
      %v1020 = vpop.f32.mrf.mxu0
      %v1021 = vadd.f32 %v926, %v1020
      %v1022 = vpop.f32.mrf.mxu0
      %v1023 = vadd.f32 %v926, %v1022
      %1024 = vdwg.mxu0
      %v1025 = vpack.c.bf16 %v988, %v986
      %v1026 = vpack.c.bf16 %v993, %v991
      %v1027 = vpack.c.bf16 %v998, %v996
      %v1028 = vpack.c.bf16 %v1003, %v1001
      %v1029 = vpack.c.bf16 %v1008, %v1006
      %v1030 = vpack.c.bf16 %v1013, %v1011
      %v1031 = vpack.c.bf16 %v1018, %v1016
      %v1032 = vpack.c.bf16 %v1023, %v1021
      %v1033 = vld [vmem:[#allocation2] sm:$0xf]
      %v1034 = vld [vmem:[#allocation2 + $0x4] sm:$0xf]
      %v1035 = vld [vmem:[#allocation2 + $0x8] sm:$0xf]
      %v1036 = vld [vmem:[#allocation2 + $0xc] sm:$0xf]
      %v1037 = vld [vmem:[#allocation2 + $0x10] sm:$0xf]
      %v1038 = vld [vmem:[#allocation2 + $0x14] sm:$0xf]
      %v1039 = vld [vmem:[#allocation2 + $0x18] sm:$0xf]
      %v1040 = vld [vmem:[#allocation2 + $0x1c] sm:$0xf]
      %v1041 = vld [vmem:[#allocation2 + $0x20] sm:$0xf]
      %v1042 = vld [vmem:[#allocation2 + $0x24] sm:$0xf]
      %v1043 = vld [vmem:[#allocation2 + $0x28] sm:$0xf]
      %v1044 = vld [vmem:[#allocation2 + $0x2c] sm:$0xf]
      %v1045 = vld [vmem:[#allocation2 + $0x30] sm:$0xf]
      %v1046 = vld [vmem:[#allocation2 + $0x34] sm:$0xf]
      %v1047 = vld [vmem:[#allocation2 + $0x38] sm:$0xf]
      %v1048 = vld [vmem:[#allocation2 + $0x3c] sm:$0xf]
      %v1049 = vld [vmem:[%s372] sm:$0x1]
      %v1051 = vperm.slane %v1049, 0
      %v1069 = vunpack.c.l.b16 %v1033
      %v1070 = vunpack.c.l.b16 %v1034
      %v1071 = vunpack.c.l.b16 %v1035
      %v1072 = vunpack.c.l.b16 %v1036
      %v1073 = vunpack.c.l.b16 %v1037
      %v1074 = vunpack.c.l.b16 %v1038
      %v1075 = vunpack.c.l.b16 %v1039
      %v1076 = vunpack.c.l.b16 %v1040
      %v1077 = vunpack.c.l.b16 %v1041
      %v1078 = vunpack.c.l.b16 %v1042
      %v1079 = vunpack.c.l.b16 %v1043
      %v1080 = vunpack.c.l.b16 %v1044
      %v1081 = vunpack.c.l.b16 %v1045
      %v1082 = vunpack.c.l.b16 %v1046
      %v1083 = vunpack.c.l.b16 %v1047
      %v1084 = vunpack.c.l.b16 %v1048
      %v1085 = vpack.c.b16 %v1070, %v1069
      %v1086 = vpack.c.b16 %v1072, %v1071
      %v1087 = vpack.c.b16 %v1074, %v1073
      %v1088 = vpack.c.b16 %v1076, %v1075
      %v1089 = vpack.c.b16 %v1078, %v1077
      %v1090 = vpack.c.b16 %v1080, %v1079
      %v1091 = vpack.c.b16 %v1082, %v1081
      %v1092 = vpack.c.b16 %v1084, %v1083
      %1101 = vmatpush.bf16.xpose.msra.mxu0 %v1032
      %1102 = vmatpush.bf16.xpose.msra.mxu0 %v1031
      %1103 = vmatpush.bf16.xpose.msra.mxu0 %v1030
      %1104 = vmatpush.bf16.xpose.msra.mxu0 %v1029
      %1105 = vmatpush.bf16.xpose.msra.mxu0 %v1028
      %1106 = vmatpush.bf16.xpose.msra.mxu0 %v1027
      %1107 = vmatpush.bf16.xpose.msra.mxu0 %v1026
      %1108 = vmatpush.bf16.xpose.msra.mxu0 %v1025
      %1109 = vmatmul.bf16.gmra.mxu0 %v1085
      %v1110 = vpop.f32.mrf.mxu0
      %v1111 = vadd.f32 %v1051, %v1110
      %v1112 = vpop.f32.mrf.mxu0
      %v1113 = vadd.f32 %v1051, %v1112
      %1114 = vmatmul.bf16.gmra.mxu0 %v1086
      %v1115 = vpop.f32.mrf.mxu0
      %v1116 = vadd.f32 %v1051, %v1115
      %v1117 = vpop.f32.mrf.mxu0
      %v1118 = vadd.f32 %v1051, %v1117
      %1119 = vmatmul.bf16.gmra.mxu0 %v1087
      %v1120 = vpop.f32.mrf.mxu0
      %v1121 = vadd.f32 %v1051, %v1120
      %v1122 = vpop.f32.mrf.mxu0
      %v1123 = vadd.f32 %v1051, %v1122
      %1124 = vmatmul.bf16.gmra.mxu0 %v1088
      %v1125 = vpop.f32.mrf.mxu0
      %v1126 = vadd.f32 %v1051, %v1125
      %v1127 = vpop.f32.mrf.mxu0
      %v1128 = vadd.f32 %v1051, %v1127
      %1129 = vmatmul.bf16.gmra.mxu0 %v1089
      %v1130 = vpop.f32.mrf.mxu0
      %v1131 = vadd.f32 %v1051, %v1130
      %v1132 = vpop.f32.mrf.mxu0
      %v1133 = vadd.f32 %v1051, %v1132
      %1134 = vmatmul.bf16.gmra.mxu0 %v1090
      %v1135 = vpop.f32.mrf.mxu0
      %v1136 = vadd.f32 %v1051, %v1135
      %v1137 = vpop.f32.mrf.mxu0
      %v1138 = vadd.f32 %v1051, %v1137
      %1139 = vmatmul.bf16.gmra.mxu0 %v1091
      %v1140 = vpop.f32.mrf.mxu0
      %v1141 = vadd.f32 %v1051, %v1140
      %v1142 = vpop.f32.mrf.mxu0
      %v1143 = vadd.f32 %v1051, %v1142
      %1144 = vmatmul.bf16.gmra.mxu0 %v1092
      %v1145 = vpop.f32.mrf.mxu0
      %v1146 = vadd.f32 %v1051, %v1145
      %v1147 = vpop.f32.mrf.mxu0
      %v1148 = vadd.f32 %v1051, %v1147
      %1149 = vdwg.mxu0
      %v1150 = vld [vmem:[#allocation3] sm:$0xff]
      %v1151 = vld [vmem:[#allocation3 + $0x8] sm:$0xff]
      %v1152 = vld [vmem:[#allocation3 + $0x10] sm:$0xff]
      %v1153 = vld [vmem:[#allocation3 + $0x18] sm:$0xff]
      %v1154 = vld [vmem:[#allocation3 + $0x20] sm:$0xff]
      %v1155 = vld [vmem:[#allocation3 + $0x28] sm:$0xff]
      %v1156 = vld [vmem:[#allocation3 + $0x30] sm:$0xff]
      %v1157 = vld [vmem:[#allocation3 + $0x38] sm:$0xff]
      %v1158 = vld [vmem:[#allocation3 + $0x40] sm:$0xff]
      %v1159 = vld [vmem:[#allocation3 + $0x48] sm:$0xff]
      %v1160 = vld [vmem:[#allocation3 + $0x50] sm:$0xff]
      %v1161 = vld [vmem:[#allocation3 + $0x58] sm:$0xff]
      %v1162 = vld [vmem:[#allocation3 + $0x60] sm:$0xff]
      %v1163 = vld [vmem:[#allocation3 + $0x68] sm:$0xff]
      %v1164 = vld [vmem:[#allocation3 + $0x70] sm:$0xff]
      %v1165 = vld [vmem:[#allocation3 + $0x78] sm:$0xff]
      %1166 = vmax.xlane.f32.xlu0 %v1111
      %v1167 = vpop.xlane.xlu0 %1166
      %1168 = vmax.xlane.f32.xlu0 %v1113
      %v1169 = vpop.xlane.xlu0 %1168
      %1170 = vmax.xlane.f32.xlu0 %v1116
      %v1171 = vpop.xlane.xlu0 %1170
      %1172 = vmax.xlane.f32.xlu0 %v1118
      %v1173 = vpop.xlane.xlu0 %1172
      %1174 = vmax.xlane.f32.xlu0 %v1121
      %v1175 = vpop.xlane.xlu0 %1174
      %1176 = vmax.xlane.f32.xlu0 %v1123
      %v1177 = vpop.xlane.xlu0 %1176
      %1178 = vmax.xlane.f32.xlu0 %v1126
      %v1179 = vpop.xlane.xlu0 %1178
      %1180 = vmax.xlane.f32.xlu0 %v1128
      %v1181 = vpop.xlane.xlu0 %1180
      %1182 = vmax.xlane.f32.xlu0 %v1131
      %v1183 = vpop.xlane.xlu0 %1182
      %1184 = vmax.xlane.f32.xlu0 %v1133
      %v1185 = vpop.xlane.xlu0 %1184
      %1186 = vmax.xlane.f32.xlu0 %v1136
      %v1187 = vpop.xlane.xlu0 %1186
      %1188 = vmax.xlane.f32.xlu0 %v1138
      %v1189 = vpop.xlane.xlu0 %1188
      %1190 = vmax.xlane.f32.xlu0 %v1141
      %v1191 = vpop.xlane.xlu0 %1190
      %1192 = vmax.xlane.f32.xlu0 %v1143
      %v1193 = vpop.xlane.xlu0 %1192
      %1194 = vmax.xlane.f32.xlu0 %v1146
      %v1195 = vpop.xlane.xlu0 %1194
      %1196 = vmax.xlane.f32.xlu0 %v1148
      %v1197 = vpop.xlane.xlu0 %1196
      %v1198 = vmax.f32 %v1150, %v1167
      %v1199 = vmax.f32 %v1151, %v1169
      %v1200 = vmax.f32 %v1152, %v1171
      %v1201 = vmax.f32 %v1153, %v1173
      %v1202 = vmax.f32 %v1154, %v1175
      %v1203 = vmax.f32 %v1155, %v1177
      %v1204 = vmax.f32 %v1156, %v1179
      %v1205 = vmax.f32 %v1157, %v1181
      %v1206 = vmax.f32 %v1158, %v1183
      %v1207 = vmax.f32 %v1159, %v1185
      %v1208 = vmax.f32 %v1160, %v1187
      %v1209 = vmax.f32 %v1161, %v1189
      %v1210 = vmax.f32 %v1162, %v1191
      %v1211 = vmax.f32 %v1163, %v1193
      %v1212 = vmax.f32 %v1164, %v1195
      %v1213 = vmax.f32 %v1165, %v1197
      %v1214 = vsub.f32 %v1150, %v1198
      %v1215 = vsub.f32 %v1151, %v1199
      %v1216 = vsub.f32 %v1152, %v1200
      %v1217 = vsub.f32 %v1153, %v1201
      %v1218 = vsub.f32 %v1154, %v1202
      %v1219 = vsub.f32 %v1155, %v1203
      %v1220 = vsub.f32 %v1156, %v1204
      %v1221 = vsub.f32 %v1157, %v1205
      %v1222 = vsub.f32 %v1158, %v1206
      %v1223 = vsub.f32 %v1159, %v1207
      %v1224 = vsub.f32 %v1160, %v1208
      %v1225 = vsub.f32 %v1161, %v1209
      %v1226 = vsub.f32 %v1162, %v1210
      %v1227 = vsub.f32 %v1163, %v1211
      %v1228 = vsub.f32 %v1164, %v1212
      %v1229 = vsub.f32 %v1165, %v1213
      %v1230 = vmul.f32 %v1214, 1.442695
      %v1231 = vpow.pop %v1230
      %v1232 = vmul.f32 %v1215, 1.442695
      %v1233 = vpow.pop %v1232
      %v1234 = vmul.f32 %v1216, 1.442695
      %v1235 = vpow.pop %v1234
      %v1236 = vmul.f32 %v1217, 1.442695
      %v1237 = vpow.pop %v1236
      %v1238 = vmul.f32 %v1218, 1.442695
      %v1239 = vpow.pop %v1238
      %v1240 = vmul.f32 %v1219, 1.442695
      %v1241 = vpow.pop %v1240
      %v1242 = vmul.f32 %v1220, 1.442695
      %v1243 = vpow.pop %v1242
      %v1244 = vmul.f32 %v1221, 1.442695
      %v1245 = vpow.pop %v1244
      %v1246 = vmul.f32 %v1222, 1.442695
      %v1247 = vpow.pop %v1246
      %v1248 = vmul.f32 %v1223, 1.442695
      %v1249 = vpow.pop %v1248
      %v1250 = vmul.f32 %v1224, 1.442695
      %v1251 = vpow.pop %v1250
      %v1252 = vmul.f32 %v1225, 1.442695
      %v1253 = vpow.pop %v1252
      %v1254 = vmul.f32 %v1226, 1.442695
      %v1255 = vpow.pop %v1254
      %v1256 = vmul.f32 %v1227, 1.442695
      %v1257 = vpow.pop %v1256
      %v1258 = vmul.f32 %v1228, 1.442695
      %v1259 = vpow.pop %v1258
      %v1260 = vmul.f32 %v1229, 1.442695
      %v1261 = vpow.pop %v1260
      %1263 = vset.pattern.permute.xlu0 0
      %1264 = vperm.xlu0 %1263, %v1198
      %v1265 = vpop.permute.xlu0 %1264
      %1268 = vset.pattern.permute.xlu0 0
      %1269 = vperm.xlu0 %1268, %v1199
      %v1270 = vpop.permute.xlu0 %1269
      %1273 = vset.pattern.permute.xlu0 0
      %1274 = vperm.xlu0 %1273, %v1200
      %v1275 = vpop.permute.xlu0 %1274
      %1278 = vset.pattern.permute.xlu0 0
      %1279 = vperm.xlu0 %1278, %v1201
      %v1280 = vpop.permute.xlu0 %1279
      %1283 = vset.pattern.permute.xlu0 0
      %1284 = vperm.xlu0 %1283, %v1202
      %v1285 = vpop.permute.xlu0 %1284
      %1288 = vset.pattern.permute.xlu0 0
      %1289 = vperm.xlu0 %1288, %v1203
      %v1290 = vpop.permute.xlu0 %1289
      %1293 = vset.pattern.permute.xlu0 0
      %1294 = vperm.xlu0 %1293, %v1204
      %v1295 = vpop.permute.xlu0 %1294
      %1298 = vset.pattern.permute.xlu0 0
      %1299 = vperm.xlu0 %1298, %v1205
      %v1300 = vpop.permute.xlu0 %1299
      %1303 = vset.pattern.permute.xlu0 0
      %1304 = vperm.xlu0 %1303, %v1206
      %v1305 = vpop.permute.xlu0 %1304
      %1308 = vset.pattern.permute.xlu0 0
      %1309 = vperm.xlu0 %1308, %v1207
      %v1310 = vpop.permute.xlu0 %1309
      %1313 = vset.pattern.permute.xlu0 0
      %1314 = vperm.xlu0 %1313, %v1208
      %v1315 = vpop.permute.xlu0 %1314
      %1318 = vset.pattern.permute.xlu0 0
      %1319 = vperm.xlu0 %1318, %v1209
      %v1320 = vpop.permute.xlu0 %1319
      %1323 = vset.pattern.permute.xlu0 0
      %1324 = vperm.xlu0 %1323, %v1210
      %v1325 = vpop.permute.xlu0 %1324
      %1328 = vset.pattern.permute.xlu0 0
      %1329 = vperm.xlu0 %1328, %v1211
      %v1330 = vpop.permute.xlu0 %1329
      %1333 = vset.pattern.permute.xlu0 0
      %1334 = vperm.xlu0 %1333, %v1212
      %v1335 = vpop.permute.xlu0 %1334
      %1338 = vset.pattern.permute.xlu0 0
      %1339 = vperm.xlu0 %1338, %v1213
      %v1340 = vpop.permute.xlu0 %1339
      %v1342 = vsub.f32 %v1111, %v1265
      %v1343 = vsub.f32 %v1113, %v1270
      %v1344 = vsub.f32 %v1116, %v1275
      %v1345 = vsub.f32 %v1118, %v1280
      %v1346 = vsub.f32 %v1121, %v1285
      %v1347 = vsub.f32 %v1123, %v1290
      %v1348 = vsub.f32 %v1126, %v1295
      %v1349 = vsub.f32 %v1128, %v1300
      %v1350 = vsub.f32 %v1131, %v1305
      %v1351 = vsub.f32 %v1133, %v1310
      %v1352 = vsub.f32 %v1136, %v1315
      %v1353 = vsub.f32 %v1138, %v1320
      %v1354 = vsub.f32 %v1141, %v1325
      %v1355 = vsub.f32 %v1143, %v1330
      %v1356 = vsub.f32 %v1146, %v1335
      %v1357 = vsub.f32 %v1148, %v1340
      %v1358 = vmul.f32 %v1342, 1.442695
      %v1359 = vpow.pop %v1358
      %v1360 = vmul.f32 %v1343, 1.442695
      %v1361 = vpow.pop %v1360
      %v1362 = vmul.f32 %v1344, 1.442695
      %v1363 = vpow.pop %v1362
      %v1364 = vmul.f32 %v1345, 1.442695
      %v1365 = vpow.pop %v1364
      %v1366 = vmul.f32 %v1346, 1.442695
      %v1367 = vpow.pop %v1366
      %v1368 = vmul.f32 %v1347, 1.442695
      %v1369 = vpow.pop %v1368
      %v1370 = vmul.f32 %v1348, 1.442695
      %v1371 = vpow.pop %v1370
      %v1372 = vmul.f32 %v1349, 1.442695
      %v1373 = vpow.pop %v1372
      %v1374 = vmul.f32 %v1350, 1.442695
      %v1375 = vpow.pop %v1374
      %v1376 = vmul.f32 %v1351, 1.442695
      %v1377 = vpow.pop %v1376
      %v1378 = vmul.f32 %v1352, 1.442695
      %v1379 = vpow.pop %v1378
      %v1380 = vmul.f32 %v1353, 1.442695
      %v1381 = vpow.pop %v1380
      %v1382 = vmul.f32 %v1354, 1.442695
      %v1383 = vpow.pop %v1382
      %v1384 = vmul.f32 %v1355, 1.442695
      %v1385 = vpow.pop %v1384
      %v1386 = vmul.f32 %v1356, 1.442695
      %v1387 = vpow.pop %v1386
      %v1388 = vmul.f32 %v1357, 1.442695
      %v1389 = vpow.pop %v1388
      %v1390 = vld [vmem:[#allocation4] sm:$0xff]
      %v1391 = vld [vmem:[#allocation4 + $0x8] sm:$0xff]
      %v1392 = vld [vmem:[#allocation4 + $0x10] sm:$0xff]
      %v1393 = vld [vmem:[#allocation4 + $0x18] sm:$0xff]
      %v1394 = vld [vmem:[#allocation4 + $0x20] sm:$0xff]
      %v1395 = vld [vmem:[#allocation4 + $0x28] sm:$0xff]
      %v1396 = vld [vmem:[#allocation4 + $0x30] sm:$0xff]
      %v1397 = vld [vmem:[#allocation4 + $0x38] sm:$0xff]
      %v1398 = vld [vmem:[#allocation4 + $0x40] sm:$0xff]
      %v1399 = vld [vmem:[#allocation4 + $0x48] sm:$0xff]
      %v1400 = vld [vmem:[#allocation4 + $0x50] sm:$0xff]
      %v1401 = vld [vmem:[#allocation4 + $0x58] sm:$0xff]
      %v1402 = vld [vmem:[#allocation4 + $0x60] sm:$0xff]
      %v1403 = vld [vmem:[#allocation4 + $0x68] sm:$0xff]
      %v1404 = vld [vmem:[#allocation4 + $0x70] sm:$0xff]
      %v1405 = vld [vmem:[#allocation4 + $0x78] sm:$0xff]
      %1407 = vset.pattern.permute.xlu0 0
      %1408 = vperm.xlu0 %1407, %v1231
      %v1409 = vpop.permute.xlu0 %1408
      %1412 = vset.pattern.permute.xlu0 0
      %1413 = vperm.xlu0 %1412, %v1233
      %v1414 = vpop.permute.xlu0 %1413
      %1417 = vset.pattern.permute.xlu0 0
      %1418 = vperm.xlu0 %1417, %v1235
      %v1419 = vpop.permute.xlu0 %1418
      %1422 = vset.pattern.permute.xlu0 0
      %1423 = vperm.xlu0 %1422, %v1237
      %v1424 = vpop.permute.xlu0 %1423
      %1427 = vset.pattern.permute.xlu0 0
      %1428 = vperm.xlu0 %1427, %v1239
      %v1429 = vpop.permute.xlu0 %1428
      %1432 = vset.pattern.permute.xlu0 0
      %1433 = vperm.xlu0 %1432, %v1241
      %v1434 = vpop.permute.xlu0 %1433
      %1437 = vset.pattern.permute.xlu0 0
      %1438 = vperm.xlu0 %1437, %v1243
      %v1439 = vpop.permute.xlu0 %1438
      %1442 = vset.pattern.permute.xlu0 0
      %1443 = vperm.xlu0 %1442, %v1245
      %v1444 = vpop.permute.xlu0 %1443
      %1447 = vset.pattern.permute.xlu0 0
      %1448 = vperm.xlu0 %1447, %v1247
      %v1449 = vpop.permute.xlu0 %1448
      %1452 = vset.pattern.permute.xlu0 0
      %1453 = vperm.xlu0 %1452, %v1249
      %v1454 = vpop.permute.xlu0 %1453
      %1457 = vset.pattern.permute.xlu0 0
      %1458 = vperm.xlu0 %1457, %v1251
      %v1459 = vpop.permute.xlu0 %1458
      %1462 = vset.pattern.permute.xlu0 0
      %1463 = vperm.xlu0 %1462, %v1253
      %v1464 = vpop.permute.xlu0 %1463
      %1467 = vset.pattern.permute.xlu0 0
      %1468 = vperm.xlu0 %1467, %v1255
      %v1469 = vpop.permute.xlu0 %1468
      %1472 = vset.pattern.permute.xlu0 0
      %1473 = vperm.xlu0 %1472, %v1257
      %v1474 = vpop.permute.xlu0 %1473
      %1477 = vset.pattern.permute.xlu0 0
      %1478 = vperm.xlu0 %1477, %v1259
      %v1479 = vpop.permute.xlu0 %1478
      %1482 = vset.pattern.permute.xlu0 0
      %1483 = vperm.xlu0 %1482, %v1261
      %v1484 = vpop.permute.xlu0 %1483
      %v1486 = vmul.f32 %v1409, %v1390
      %v1487 = vmul.f32 %v1414, %v1391
      %v1488 = vmul.f32 %v1419, %v1392
      %v1489 = vmul.f32 %v1424, %v1393
      %v1490 = vmul.f32 %v1429, %v1394
      %v1491 = vmul.f32 %v1434, %v1395
      %v1492 = vmul.f32 %v1439, %v1396
      %v1493 = vmul.f32 %v1444, %v1397
      %v1494 = vmul.f32 %v1449, %v1398
      %v1495 = vmul.f32 %v1454, %v1399
      %v1496 = vmul.f32 %v1459, %v1400
      %v1497 = vmul.f32 %v1464, %v1401
      %v1498 = vmul.f32 %v1469, %v1402
      %v1499 = vmul.f32 %v1474, %v1403
      %v1500 = vmul.f32 %v1479, %v1404
      %v1501 = vmul.f32 %v1484, %v1405
      %v1502 = vpack.c.bf16 %v1361, %v1359
      %v1503 = vpack.c.bf16 %v1365, %v1363
      %v1504 = vpack.c.bf16 %v1369, %v1367
      %v1505 = vpack.c.bf16 %v1373, %v1371
      %v1506 = vpack.c.bf16 %v1377, %v1375
      %v1507 = vpack.c.bf16 %v1381, %v1379
      %v1508 = vpack.c.bf16 %v1385, %v1383
      %v1509 = vpack.c.bf16 %v1389, %v1387
      %v1510 = vld [vmem:[%s368] sm:$0xf]
      %v1511 = vld [vmem:[%s368 + $0x4] sm:$0xf]
      %v1512 = vld [vmem:[%s368 + $0x8] sm:$0xf]
      %v1513 = vld [vmem:[%s368 + $0xc] sm:$0xf]
      %v1514 = vld [vmem:[%s368 + $0x10] sm:$0xf]
      %v1515 = vld [vmem:[%s368 + $0x14] sm:$0xf]
      %v1516 = vld [vmem:[%s368 + $0x18] sm:$0xf]
      %v1517 = vld [vmem:[%s368 + $0x1c] sm:$0xf]
      %v1518 = vld [vmem:[%s368 + $0x20] sm:$0xf]
      %v1519 = vld [vmem:[%s368 + $0x24] sm:$0xf]
      %v1520 = vld [vmem:[%s368 + $0x28] sm:$0xf]
      %v1521 = vld [vmem:[%s368 + $0x2c] sm:$0xf]
      %v1522 = vld [vmem:[%s368 + $0x30] sm:$0xf]
      %v1523 = vld [vmem:[%s368 + $0x34] sm:$0xf]
      %v1524 = vld [vmem:[%s368 + $0x38] sm:$0xf]
      %v1525 = vld [vmem:[%s368 + $0x3c] sm:$0xf]
      %v1542 = vunpack.c.l.b16 %v1510
      %v1543 = vunpack.c.l.b16 %v1511
      %v1544 = vunpack.c.l.b16 %v1512
      %v1545 = vunpack.c.l.b16 %v1513
      %v1546 = vunpack.c.l.b16 %v1514
      %v1547 = vunpack.c.l.b16 %v1515
      %v1548 = vunpack.c.l.b16 %v1516
      %v1549 = vunpack.c.l.b16 %v1517
      %v1550 = vunpack.c.l.b16 %v1518
      %v1551 = vunpack.c.l.b16 %v1519
      %v1552 = vunpack.c.l.b16 %v1520
      %v1553 = vunpack.c.l.b16 %v1521
      %v1554 = vunpack.c.l.b16 %v1522
      %v1555 = vunpack.c.l.b16 %v1523
      %v1556 = vunpack.c.l.b16 %v1524
      %v1557 = vunpack.c.l.b16 %v1525
      %v1558 = vpack.c.b16 %v1543, %v1542
      %v1559 = vpack.c.b16 %v1545, %v1544
      %v1560 = vpack.c.b16 %v1547, %v1546
      %v1561 = vpack.c.b16 %v1549, %v1548
      %v1562 = vpack.c.b16 %v1551, %v1550
      %v1563 = vpack.c.b16 %v1553, %v1552
      %v1564 = vpack.c.b16 %v1555, %v1554
      %v1565 = vpack.c.b16 %v1557, %v1556
      %1574 = vmatpush.bf16.msra.mxu0 %v1565
      %1575 = vmatpush.bf16.msra.mxu0 %v1564
      %1576 = vmatpush.bf16.msra.mxu0 %v1563
      %1577 = vmatpush.bf16.msra.mxu0 %v1562
      %1578 = vmatpush.bf16.msra.mxu0 %v1561
      %1579 = vmatpush.bf16.msra.mxu0 %v1560
      %1580 = vmatpush.bf16.msra.mxu0 %v1559
      %1581 = vmatpush.bf16.msra.mxu0 %v1558
      %1582 = vmatmul.bf16.gmra.mxu0 %v1502
      %v1583 = vpop.f32.mrf.mxu0
      %v1584 = vadd.f32 0.0, %v1583
      %v1585 = vpop.f32.mrf.mxu0
      %v1586 = vadd.f32 0.0, %v1585
      %1587 = vmatmul.bf16.gmra.mxu0 %v1503
      %v1588 = vpop.f32.mrf.mxu0
      %v1589 = vadd.f32 0.0, %v1588
      %v1590 = vpop.f32.mrf.mxu0
      %v1591 = vadd.f32 0.0, %v1590
      %1592 = vmatmul.bf16.gmra.mxu0 %v1504
      %v1593 = vpop.f32.mrf.mxu0
      %v1594 = vadd.f32 0.0, %v1593
      %v1595 = vpop.f32.mrf.mxu0
      %v1596 = vadd.f32 0.0, %v1595
      %1597 = vmatmul.bf16.gmra.mxu0 %v1505
      %v1598 = vpop.f32.mrf.mxu0
      %v1599 = vadd.f32 0.0, %v1598
      %v1600 = vpop.f32.mrf.mxu0
      %v1601 = vadd.f32 0.0, %v1600
      %1602 = vmatmul.bf16.gmra.mxu0 %v1506
      %v1603 = vpop.f32.mrf.mxu0
      %v1604 = vadd.f32 0.0, %v1603
      %v1605 = vpop.f32.mrf.mxu0
      %v1606 = vadd.f32 0.0, %v1605
      %1607 = vmatmul.bf16.gmra.mxu0 %v1507
      %v1608 = vpop.f32.mrf.mxu0
      %v1609 = vadd.f32 0.0, %v1608
      %v1610 = vpop.f32.mrf.mxu0
      %v1611 = vadd.f32 0.0, %v1610
      %1612 = vmatmul.bf16.gmra.mxu0 %v1508
      %v1613 = vpop.f32.mrf.mxu0
      %v1614 = vadd.f32 0.0, %v1613
      %v1615 = vpop.f32.mrf.mxu0
      %v1616 = vadd.f32 0.0, %v1615
      %1617 = vmatmul.bf16.gmra.mxu0 %v1509
      %v1618 = vpop.f32.mrf.mxu0
      %v1619 = vadd.f32 0.0, %v1618
      %v1620 = vpop.f32.mrf.mxu0
      %v1621 = vadd.f32 0.0, %v1620
      %1622 = vdwg.mxu0
      %v1623 = vadd.f32 %v1486, %v1584
      %v1624 = vadd.f32 %v1487, %v1586
      %v1625 = vadd.f32 %v1488, %v1589
      %v1626 = vadd.f32 %v1489, %v1591
      %v1627 = vadd.f32 %v1490, %v1594
      %v1628 = vadd.f32 %v1491, %v1596
      %v1629 = vadd.f32 %v1492, %v1599
      %v1630 = vadd.f32 %v1493, %v1601
      %v1631 = vadd.f32 %v1494, %v1604
      %v1632 = vadd.f32 %v1495, %v1606
      %v1633 = vadd.f32 %v1496, %v1609
      %v1634 = vadd.f32 %v1497, %v1611
      %v1635 = vadd.f32 %v1498, %v1614
      %v1636 = vadd.f32 %v1499, %v1616
      %v1637 = vadd.f32 %v1500, %v1619
      %v1638 = vadd.f32 %v1501, %v1621
      %1639 = vst.msk [vmem:[#allocation4] sm:$0xff] %vm806, %v1623
      %1640 = vst.msk [vmem:[#allocation4 + $0x8] sm:$0xff] %vm806, %v1624
      %1641 = vst.msk [vmem:[#allocation4 + $0x10] sm:$0xff] %vm806, %v1625
      %1642 = vst.msk [vmem:[#allocation4 + $0x18] sm:$0xff] %vm806, %v1626
      %1643 = vst.msk [vmem:[#allocation4 + $0x20] sm:$0xff] %vm806, %v1627
      %1644 = vst.msk [vmem:[#allocation4 + $0x28] sm:$0xff] %vm806, %v1628
      %1645 = vst.msk [vmem:[#allocation4 + $0x30] sm:$0xff] %vm806, %v1629
      %1646 = vst.msk [vmem:[#allocation4 + $0x38] sm:$0xff] %vm806, %v1630
      %1647 = vst.msk [vmem:[#allocation4 + $0x40] sm:$0xff] %vm806, %v1631
      %1648 = vst.msk [vmem:[#allocation4 + $0x48] sm:$0xff] %vm806, %v1632
      %1649 = vst.msk [vmem:[#allocation4 + $0x50] sm:$0xff] %vm806, %v1633
      %1650 = vst.msk [vmem:[#allocation4 + $0x58] sm:$0xff] %vm806, %v1634
      %1651 = vst.msk [vmem:[#allocation4 + $0x60] sm:$0xff] %vm806, %v1635
      %1652 = vst.msk [vmem:[#allocation4 + $0x68] sm:$0xff] %vm806, %v1636
      %1653 = vst.msk [vmem:[#allocation4 + $0x70] sm:$0xff] %vm806, %v1637
      %1654 = vst.msk [vmem:[#allocation4 + $0x78] sm:$0xff] %vm806, %v1638
      %vm1655 = vcmask 7168
      %1656 = vst.msk [vmem:[#allocation3] sm:$0xff] %vm1655, %v1198
      %1657 = vst.msk [vmem:[#allocation3 + $0x8] sm:$0xff] %vm1655, %v1199
      %1658 = vst.msk [vmem:[#allocation3 + $0x10] sm:$0xff] %vm1655, %v1200
      %1659 = vst.msk [vmem:[#allocation3 + $0x18] sm:$0xff] %vm1655, %v1201
      %1660 = vst.msk [vmem:[#allocation3 + $0x20] sm:$0xff] %vm1655, %v1202
      %1661 = vst.msk [vmem:[#allocation3 + $0x28] sm:$0xff] %vm1655, %v1203
      %1662 = vst.msk [vmem:[#allocation3 + $0x30] sm:$0xff] %vm1655, %v1204
      %1663 = vst.msk [vmem:[#allocation3 + $0x38] sm:$0xff] %vm1655, %v1205
      %1664 = vst.msk [vmem:[#allocation3 + $0x40] sm:$0xff] %vm1655, %v1206
      %1665 = vst.msk [vmem:[#allocation3 + $0x48] sm:$0xff] %vm1655, %v1207
      %1666 = vst.msk [vmem:[#allocation3 + $0x50] sm:$0xff] %vm1655, %v1208
      %1667 = vst.msk [vmem:[#allocation3 + $0x58] sm:$0xff] %vm1655, %v1209
      %1668 = vst.msk [vmem:[#allocation3 + $0x60] sm:$0xff] %vm1655, %v1210
      %1669 = vst.msk [vmem:[#allocation3 + $0x68] sm:$0xff] %vm1655, %v1211
      %1670 = vst.msk [vmem:[#allocation3 + $0x70] sm:$0xff] %vm1655, %v1212
      %1671 = vst.msk [vmem:[#allocation3 + $0x78] sm:$0xff] %vm1655, %v1213
      %p1672 = scmp.eq.s32.totalorder %s24, 1
      // Predicated region
      $region57: #{tpu_custom_call.1} parent=51 // pred_check
        %p1673 = pneg %p1672
      $region58: #{tpu_custom_call.1} parent=51 // pred_check_branch
        %1675 = sbr.rel (%p1673) target = $region60
      $region59: #{tpu_custom_call.1} parent=51 // pred_region
        %v1676 = vld [vmem:[#allocation4] sm:$0xff]
        %v1677 = vld [vmem:[#allocation4 + $0x8] sm:$0xff]
        %v1678 = vld [vmem:[#allocation4 + $0x10] sm:$0xff]
        %v1679 = vld [vmem:[#allocation4 + $0x18] sm:$0xff]
        %v1680 = vld [vmem:[#allocation4 + $0x20] sm:$0xff]
        %v1681 = vld [vmem:[#allocation4 + $0x28] sm:$0xff]
        %v1682 = vld [vmem:[#allocation4 + $0x30] sm:$0xff]
        %v1683 = vld [vmem:[#allocation4 + $0x38] sm:$0xff]
        %v1684 = vld [vmem:[#allocation4 + $0x40] sm:$0xff]
        %v1685 = vld [vmem:[#allocation4 + $0x48] sm:$0xff]
        %v1686 = vld [vmem:[#allocation4 + $0x50] sm:$0xff]
        %v1687 = vld [vmem:[#allocation4 + $0x58] sm:$0xff]
        %v1688 = vld [vmem:[#allocation4 + $0x60] sm:$0xff]
        %v1689 = vld [vmem:[#allocation4 + $0x68] sm:$0xff]
        %v1690 = vld [vmem:[#allocation4 + $0x70] sm:$0xff]
        %v1691 = vld [vmem:[#allocation4 + $0x78] sm:$0xff]
        %v1692 = vrcp.pop %v1676
        %v1693 = vmul.f32 %v1676, %v1692
        %v1694 = vsub.f32 1.0, %v1693
        %v1695 = vmul.f32 %v1692, %v1694
        %v1696 = vadd.f32 %v1692, %v1695
        %vm1697 = vweird.f32 %v1676
        %vm1698 = vweird.f32 %v1692
        %vm1699 = vmor %vm1697, %vm1698
        %v1700 = vsel %vm1699, %v1692, %v1696
        %v1701 = vand.u32 2147483647, %v1676
        %vm1702 = vcmp.eq.f32.partialorder %v1701, 8.507059e+37
        %v1703 = vand.u32 %v1676, 2147483648
        %v1704 = vor.u32 1.1754944e-38, %v1703
        %v1705 = vsel %vm1702, %v1704, %v1700
        %v1706 = vmul.f32 1.0, %v1705
        %v1707 = vrcp.pop %v1677
        %v1708 = vmul.f32 %v1677, %v1707
        %v1709 = vsub.f32 1.0, %v1708
        %v1710 = vmul.f32 %v1707, %v1709
        %v1711 = vadd.f32 %v1707, %v1710
        %vm1712 = vweird.f32 %v1677
        %vm1713 = vweird.f32 %v1707
        %vm1714 = vmor %vm1712, %vm1713
        %v1715 = vsel %vm1714, %v1707, %v1711
        %v1716 = vand.u32 2147483647, %v1677
        %vm1717 = vcmp.eq.f32.partialorder %v1716, 8.507059e+37
        %v1718 = vand.u32 %v1677, 2147483648
        %v1719 = vor.u32 1.1754944e-38, %v1718
        %v1720 = vsel %vm1717, %v1719, %v1715
        %v1721 = vmul.f32 1.0, %v1720
        %v1722 = vrcp.pop %v1678
        %v1723 = vmul.f32 %v1678, %v1722
        %v1724 = vsub.f32 1.0, %v1723
        %v1725 = vmul.f32 %v1722, %v1724
        %v1726 = vadd.f32 %v1722, %v1725
        %vm1727 = vweird.f32 %v1678
        %vm1728 = vweird.f32 %v1722
        %vm1729 = vmor %vm1727, %vm1728
        %v1730 = vsel %vm1729, %v1722, %v1726
        %v1731 = vand.u32 2147483647, %v1678
        %vm1732 = vcmp.eq.f32.partialorder %v1731, 8.507059e+37
        %v1733 = vand.u32 %v1678, 2147483648
        %v1734 = vor.u32 1.1754944e-38, %v1733
        %v1735 = vsel %vm1732, %v1734, %v1730
        %v1736 = vmul.f32 1.0, %v1735
        %v1737 = vrcp.pop %v1679
        %v1738 = vmul.f32 %v1679, %v1737
        %v1739 = vsub.f32 1.0, %v1738
        %v1740 = vmul.f32 %v1737, %v1739
        %v1741 = vadd.f32 %v1737, %v1740
        %vm1742 = vweird.f32 %v1679
        %vm1743 = vweird.f32 %v1737
        %vm1744 = vmor %vm1742, %vm1743
        %v1745 = vsel %vm1744, %v1737, %v1741
        %v1746 = vand.u32 2147483647, %v1679
        %vm1747 = vcmp.eq.f32.partialorder %v1746, 8.507059e+37
        %v1748 = vand.u32 %v1679, 2147483648
        %v1749 = vor.u32 1.1754944e-38, %v1748
        %v1750 = vsel %vm1747, %v1749, %v1745
        %v1751 = vmul.f32 1.0, %v1750
        %v1752 = vrcp.pop %v1680
        %v1753 = vmul.f32 %v1680, %v1752
        %v1754 = vsub.f32 1.0, %v1753
        %v1755 = vmul.f32 %v1752, %v1754
        %v1756 = vadd.f32 %v1752, %v1755
        %vm1757 = vweird.f32 %v1680
        %vm1758 = vweird.f32 %v1752
        %vm1759 = vmor %vm1757, %vm1758
        %v1760 = vsel %vm1759, %v1752, %v1756
        %v1761 = vand.u32 2147483647, %v1680
        %vm1762 = vcmp.eq.f32.partialorder %v1761, 8.507059e+37
        %v1763 = vand.u32 %v1680, 2147483648
        %v1764 = vor.u32 1.1754944e-38, %v1763
        %v1765 = vsel %vm1762, %v1764, %v1760
        %v1766 = vmul.f32 1.0, %v1765
        %v1767 = vrcp.pop %v1681
        %v1768 = vmul.f32 %v1681, %v1767
        %v1769 = vsub.f32 1.0, %v1768
        %v1770 = vmul.f32 %v1767, %v1769
        %v1771 = vadd.f32 %v1767, %v1770
        %vm1772 = vweird.f32 %v1681
        %vm1773 = vweird.f32 %v1767
        %vm1774 = vmor %vm1772, %vm1773
        %v1775 = vsel %vm1774, %v1767, %v1771
        %v1776 = vand.u32 2147483647, %v1681
        %vm1777 = vcmp.eq.f32.partialorder %v1776, 8.507059e+37
        %v1778 = vand.u32 %v1681, 2147483648
        %v1779 = vor.u32 1.1754944e-38, %v1778
        %v1780 = vsel %vm1777, %v1779, %v1775
        %v1781 = vmul.f32 1.0, %v1780
        %v1782 = vrcp.pop %v1682
        %v1783 = vmul.f32 %v1682, %v1782
        %v1784 = vsub.f32 1.0, %v1783
        %v1785 = vmul.f32 %v1782, %v1784
        %v1786 = vadd.f32 %v1782, %v1785
        %vm1787 = vweird.f32 %v1682
        %vm1788 = vweird.f32 %v1782
        %vm1789 = vmor %vm1787, %vm1788
        %v1790 = vsel %vm1789, %v1782, %v1786
        %v1791 = vand.u32 2147483647, %v1682
        %vm1792 = vcmp.eq.f32.partialorder %v1791, 8.507059e+37
        %v1793 = vand.u32 %v1682, 2147483648
        %v1794 = vor.u32 1.1754944e-38, %v1793
        %v1795 = vsel %vm1792, %v1794, %v1790
        %v1796 = vmul.f32 1.0, %v1795
        %v1797 = vrcp.pop %v1683
        %v1798 = vmul.f32 %v1683, %v1797
        %v1799 = vsub.f32 1.0, %v1798
        %v1800 = vmul.f32 %v1797, %v1799
        %v1801 = vadd.f32 %v1797, %v1800
        %vm1802 = vweird.f32 %v1683
        %vm1803 = vweird.f32 %v1797
        %vm1804 = vmor %vm1802, %vm1803
        %v1805 = vsel %vm1804, %v1797, %v1801
        %v1806 = vand.u32 2147483647, %v1683
        %vm1807 = vcmp.eq.f32.partialorder %v1806, 8.507059e+37
        %v1808 = vand.u32 %v1683, 2147483648
        %v1809 = vor.u32 1.1754944e-38, %v1808
        %v1810 = vsel %vm1807, %v1809, %v1805
        %v1811 = vmul.f32 1.0, %v1810
        %v1812 = vrcp.pop %v1684
        %v1813 = vmul.f32 %v1684, %v1812
        %v1814 = vsub.f32 1.0, %v1813
        %v1815 = vmul.f32 %v1812, %v1814
        %v1816 = vadd.f32 %v1812, %v1815
        %vm1817 = vweird.f32 %v1684
        %vm1818 = vweird.f32 %v1812
        %vm1819 = vmor %vm1817, %vm1818
        %v1820 = vsel %vm1819, %v1812, %v1816
        %v1821 = vand.u32 2147483647, %v1684
        %vm1822 = vcmp.eq.f32.partialorder %v1821, 8.507059e+37
        %v1823 = vand.u32 %v1684, 2147483648
        %v1824 = vor.u32 1.1754944e-38, %v1823
        %v1825 = vsel %vm1822, %v1824, %v1820
        %v1826 = vmul.f32 1.0, %v1825
        %v1827 = vrcp.pop %v1685
        %v1828 = vmul.f32 %v1685, %v1827
        %v1829 = vsub.f32 1.0, %v1828
        %v1830 = vmul.f32 %v1827, %v1829
        %v1831 = vadd.f32 %v1827, %v1830
        %vm1832 = vweird.f32 %v1685
        %vm1833 = vweird.f32 %v1827
        %vm1834 = vmor %vm1832, %vm1833
        %v1835 = vsel %vm1834, %v1827, %v1831
        %v1836 = vand.u32 2147483647, %v1685
        %vm1837 = vcmp.eq.f32.partialorder %v1836, 8.507059e+37
        %v1838 = vand.u32 %v1685, 2147483648
        %v1839 = vor.u32 1.1754944e-38, %v1838
        %v1840 = vsel %vm1837, %v1839, %v1835
        %v1841 = vmul.f32 1.0, %v1840
        %v1842 = vrcp.pop %v1686
        %v1843 = vmul.f32 %v1686, %v1842
        %v1844 = vsub.f32 1.0, %v1843
        %v1845 = vmul.f32 %v1842, %v1844
        %v1846 = vadd.f32 %v1842, %v1845
        %vm1847 = vweird.f32 %v1686
        %vm1848 = vweird.f32 %v1842
        %vm1849 = vmor %vm1847, %vm1848
        %v1850 = vsel %vm1849, %v1842, %v1846
        %v1851 = vand.u32 2147483647, %v1686
        %vm1852 = vcmp.eq.f32.partialorder %v1851, 8.507059e+37
        %v1853 = vand.u32 %v1686, 2147483648
        %v1854 = vor.u32 1.1754944e-38, %v1853
        %v1855 = vsel %vm1852, %v1854, %v1850
        %v1856 = vmul.f32 1.0, %v1855
        %v1857 = vrcp.pop %v1687
        %v1858 = vmul.f32 %v1687, %v1857
        %v1859 = vsub.f32 1.0, %v1858
        %v1860 = vmul.f32 %v1857, %v1859
        %v1861 = vadd.f32 %v1857, %v1860
        %vm1862 = vweird.f32 %v1687
        %vm1863 = vweird.f32 %v1857
        %vm1864 = vmor %vm1862, %vm1863
        %v1865 = vsel %vm1864, %v1857, %v1861
        %v1866 = vand.u32 2147483647, %v1687
        %vm1867 = vcmp.eq.f32.partialorder %v1866, 8.507059e+37
        %v1868 = vand.u32 %v1687, 2147483648
        %v1869 = vor.u32 1.1754944e-38, %v1868
        %v1870 = vsel %vm1867, %v1869, %v1865
        %v1871 = vmul.f32 1.0, %v1870
        %v1872 = vrcp.pop %v1688
        %v1873 = vmul.f32 %v1688, %v1872
        %v1874 = vsub.f32 1.0, %v1873
        %v1875 = vmul.f32 %v1872, %v1874
        %v1876 = vadd.f32 %v1872, %v1875
        %vm1877 = vweird.f32 %v1688
        %vm1878 = vweird.f32 %v1872
        %vm1879 = vmor %vm1877, %vm1878
        %v1880 = vsel %vm1879, %v1872, %v1876
        %v1881 = vand.u32 2147483647, %v1688
        %vm1882 = vcmp.eq.f32.partialorder %v1881, 8.507059e+37
        %v1883 = vand.u32 %v1688, 2147483648
        %v1884 = vor.u32 1.1754944e-38, %v1883
        %v1885 = vsel %vm1882, %v1884, %v1880
        %v1886 = vmul.f32 1.0, %v1885
        %v1887 = vrcp.pop %v1689
        %v1888 = vmul.f32 %v1689, %v1887
        %v1889 = vsub.f32 1.0, %v1888
        %v1890 = vmul.f32 %v1887, %v1889
        %v1891 = vadd.f32 %v1887, %v1890
        %vm1892 = vweird.f32 %v1689
        %vm1893 = vweird.f32 %v1887
        %vm1894 = vmor %vm1892, %vm1893
        %v1895 = vsel %vm1894, %v1887, %v1891
        %v1896 = vand.u32 2147483647, %v1689
        %vm1897 = vcmp.eq.f32.partialorder %v1896, 8.507059e+37
        %v1898 = vand.u32 %v1689, 2147483648
        %v1899 = vor.u32 1.1754944e-38, %v1898
        %v1900 = vsel %vm1897, %v1899, %v1895
        %v1901 = vmul.f32 1.0, %v1900
        %v1902 = vrcp.pop %v1690
        %v1903 = vmul.f32 %v1690, %v1902
        %v1904 = vsub.f32 1.0, %v1903
        %v1905 = vmul.f32 %v1902, %v1904
        %v1906 = vadd.f32 %v1902, %v1905
        %vm1907 = vweird.f32 %v1690
        %vm1908 = vweird.f32 %v1902
        %vm1909 = vmor %vm1907, %vm1908
        %v1910 = vsel %vm1909, %v1902, %v1906
        %v1911 = vand.u32 2147483647, %v1690
        %vm1912 = vcmp.eq.f32.partialorder %v1911, 8.507059e+37
        %v1913 = vand.u32 %v1690, 2147483648
        %v1914 = vor.u32 1.1754944e-38, %v1913
        %v1915 = vsel %vm1912, %v1914, %v1910
        %v1916 = vmul.f32 1.0, %v1915
        %v1917 = vrcp.pop %v1691
        %v1918 = vmul.f32 %v1691, %v1917
        %v1919 = vsub.f32 1.0, %v1918
        %v1920 = vmul.f32 %v1917, %v1919
        %v1921 = vadd.f32 %v1917, %v1920
        %vm1922 = vweird.f32 %v1691
        %vm1923 = vweird.f32 %v1917
        %vm1924 = vmor %vm1922, %vm1923
        %v1925 = vsel %vm1924, %v1917, %v1921
        %v1926 = vand.u32 2147483647, %v1691
        %vm1927 = vcmp.eq.f32.partialorder %v1926, 8.507059e+37
        %v1928 = vand.u32 %v1691, 2147483648
        %v1929 = vor.u32 1.1754944e-38, %v1928
        %v1930 = vsel %vm1927, %v1929, %v1925
        %v1931 = vmul.f32 1.0, %v1930
        %1948 = vrot.lane.b32.xlu0 %v1676, 125
        %v1949 = vpop.permute.xlu0 %1948
        %1950 = vrot.lane.b32.xlu0 %v1677, 125
        %v1951 = vpop.permute.xlu0 %1950
        %1952 = vrot.lane.b32.xlu0 %v1678, 125
        %v1953 = vpop.permute.xlu0 %1952
        %1954 = vrot.lane.b32.xlu0 %v1679, 125
        %v1955 = vpop.permute.xlu0 %1954
        %1956 = vrot.lane.b32.xlu0 %v1680, 125
        %v1957 = vpop.permute.xlu0 %1956
        %1958 = vrot.lane.b32.xlu0 %v1681, 125
        %v1959 = vpop.permute.xlu0 %1958
        %1960 = vrot.lane.b32.xlu0 %v1682, 125
        %v1961 = vpop.permute.xlu0 %1960
        %1962 = vrot.lane.b32.xlu0 %v1683, 125
        %v1963 = vpop.permute.xlu0 %1962
        %1964 = vrot.lane.b32.xlu0 %v1684, 125
        %v1965 = vpop.permute.xlu0 %1964
        %1966 = vrot.lane.b32.xlu0 %v1685, 125
        %v1967 = vpop.permute.xlu0 %1966
        %1968 = vrot.lane.b32.xlu0 %v1686, 125
        %v1969 = vpop.permute.xlu0 %1968
        %1970 = vrot.lane.b32.xlu0 %v1687, 125
        %v1971 = vpop.permute.xlu0 %1970
        %1972 = vrot.lane.b32.xlu0 %v1688, 125
        %v1973 = vpop.permute.xlu0 %1972
        %1974 = vrot.lane.b32.xlu0 %v1689, 125
        %v1975 = vpop.permute.xlu0 %1974
        %1976 = vrot.lane.b32.xlu0 %v1690, 125
        %v1977 = vpop.permute.xlu0 %1976
        %1978 = vrot.lane.b32.xlu0 %v1691, 125
        %v1979 = vpop.permute.xlu0 %1978
        %v1996 = vadd.f32 %v1676, %v1949
        %v1997 = vadd.f32 %v1677, %v1951
        %v1998 = vadd.f32 %v1678, %v1953
        %v1999 = vadd.f32 %v1679, %v1955
        %v2000 = vadd.f32 %v1680, %v1957
        %v2001 = vadd.f32 %v1681, %v1959
        %v2002 = vadd.f32 %v1682, %v1961
        %v2003 = vadd.f32 %v1683, %v1963
        %v2004 = vadd.f32 %v1684, %v1965
        %v2005 = vadd.f32 %v1685, %v1967
        %v2006 = vadd.f32 %v1686, %v1969
        %v2007 = vadd.f32 %v1687, %v1971
        %v2008 = vadd.f32 %v1688, %v1973
        %v2009 = vadd.f32 %v1689, %v1975
        %v2010 = vadd.f32 %v1690, %v1977
        %v2011 = vadd.f32 %v1691, %v1979
        %2028 = vrot.lane.b32.xlu0 %v1706, 126
        %v2029 = vpop.permute.xlu0 %2028
        %2030 = vrot.lane.b32.xlu0 %v1721, 126
        %v2031 = vpop.permute.xlu0 %2030
        %2032 = vrot.lane.b32.xlu0 %v1736, 126
        %v2033 = vpop.permute.xlu0 %2032
        %2034 = vrot.lane.b32.xlu0 %v1751, 126
        %v2035 = vpop.permute.xlu0 %2034
        %2036 = vrot.lane.b32.xlu0 %v1766, 126
        %v2037 = vpop.permute.xlu0 %2036
        %2038 = vrot.lane.b32.xlu0 %v1781, 126
        %v2039 = vpop.permute.xlu0 %2038
        %2040 = vrot.lane.b32.xlu0 %v1796, 126
        %v2041 = vpop.permute.xlu0 %2040
        %2042 = vrot.lane.b32.xlu0 %v1811, 126
        %v2043 = vpop.permute.xlu0 %2042
        %2044 = vrot.lane.b32.xlu0 %v1826, 126
        %v2045 = vpop.permute.xlu0 %2044
        %2046 = vrot.lane.b32.xlu0 %v1841, 126
        %v2047 = vpop.permute.xlu0 %2046
        %2048 = vrot.lane.b32.xlu0 %v1856, 126
        %v2049 = vpop.permute.xlu0 %2048
        %2050 = vrot.lane.b32.xlu0 %v1871, 126
        %v2051 = vpop.permute.xlu0 %2050
        %2052 = vrot.lane.b32.xlu0 %v1886, 126
        %v2053 = vpop.permute.xlu0 %2052
        %2054 = vrot.lane.b32.xlu0 %v1901, 126
        %v2055 = vpop.permute.xlu0 %2054
        %2056 = vrot.lane.b32.xlu0 %v1916, 126
        %v2057 = vpop.permute.xlu0 %2056
        %2058 = vrot.lane.b32.xlu0 %v1931, 126
        %v2059 = vpop.permute.xlu0 %2058
        %v2076 = vmul.f32 %v1996, %v2029
        %v2077 = vmul.f32 %v1997, %v2031
        %v2078 = vmul.f32 %v1998, %v2033
        %v2079 = vmul.f32 %v1999, %v2035
        %v2080 = vmul.f32 %v2000, %v2037
        %v2081 = vmul.f32 %v2001, %v2039
        %v2082 = vmul.f32 %v2002, %v2041
        %v2083 = vmul.f32 %v2003, %v2043
        %v2084 = vmul.f32 %v2004, %v2045
        %v2085 = vmul.f32 %v2005, %v2047
        %v2086 = vmul.f32 %v2006, %v2049
        %v2087 = vmul.f32 %v2007, %v2051
        %v2088 = vmul.f32 %v2008, %v2053
        %v2089 = vmul.f32 %v2009, %v2055
        %v2090 = vmul.f32 %v2010, %v2057
        %v2091 = vmul.f32 %v2011, %v2059
        %2092 = vrot.lane.b32.xlu0 %v1706, 127
        %v2093 = vpop.permute.xlu0 %2092
        %2094 = vrot.lane.b32.xlu0 %v1721, 127
        %v2095 = vpop.permute.xlu0 %2094
        %2096 = vrot.lane.b32.xlu0 %v1736, 127
        %v2097 = vpop.permute.xlu0 %2096
        %2098 = vrot.lane.b32.xlu0 %v1751, 127
        %v2099 = vpop.permute.xlu0 %2098
        %2100 = vrot.lane.b32.xlu0 %v1766, 127
        %v2101 = vpop.permute.xlu0 %2100
        %2102 = vrot.lane.b32.xlu0 %v1781, 127
        %v2103 = vpop.permute.xlu0 %2102
        %2104 = vrot.lane.b32.xlu0 %v1796, 127
        %v2105 = vpop.permute.xlu0 %2104
        %2106 = vrot.lane.b32.xlu0 %v1811, 127
        %v2107 = vpop.permute.xlu0 %2106
        %2108 = vrot.lane.b32.xlu0 %v1826, 127
        %v2109 = vpop.permute.xlu0 %2108
        %2110 = vrot.lane.b32.xlu0 %v1841, 127
        %v2111 = vpop.permute.xlu0 %2110
        %2112 = vrot.lane.b32.xlu0 %v1856, 127
        %v2113 = vpop.permute.xlu0 %2112
        %2114 = vrot.lane.b32.xlu0 %v1871, 127
        %v2115 = vpop.permute.xlu0 %2114
        %2116 = vrot.lane.b32.xlu0 %v1886, 127
        %v2117 = vpop.permute.xlu0 %2116
        %2118 = vrot.lane.b32.xlu0 %v1901, 127
        %v2119 = vpop.permute.xlu0 %2118
        %2120 = vrot.lane.b32.xlu0 %v1916, 127
        %v2121 = vpop.permute.xlu0 %2120
        %2122 = vrot.lane.b32.xlu0 %v1931, 127
        %v2123 = vpop.permute.xlu0 %2122
        %v2140 = vmul.f32 %v1996, %v2093
        %v2141 = vmul.f32 %v1997, %v2095
        %v2142 = vmul.f32 %v1998, %v2097
        %v2143 = vmul.f32 %v1999, %v2099
        %v2144 = vmul.f32 %v2000, %v2101
        %v2145 = vmul.f32 %v2001, %v2103
        %v2146 = vmul.f32 %v2002, %v2105
        %v2147 = vmul.f32 %v2003, %v2107
        %v2148 = vmul.f32 %v2004, %v2109
        %v2149 = vmul.f32 %v2005, %v2111
        %v2150 = vmul.f32 %v2006, %v2113
        %v2151 = vmul.f32 %v2007, %v2115
        %v2152 = vmul.f32 %v2008, %v2117
        %v2153 = vmul.f32 %v2009, %v2119
        %v2154 = vmul.f32 %v2010, %v2121
        %v2155 = vmul.f32 %v2011, %v2123
        %v2156 = vadd.f32 %v2076, 1.0
        %v2157 = vadd.f32 %v2077, 1.0
        %v2158 = vadd.f32 %v2078, 1.0
        %v2159 = vadd.f32 %v2079, 1.0
        %v2160 = vadd.f32 %v2080, 1.0
        %v2161 = vadd.f32 %v2081, 1.0
        %v2162 = vadd.f32 %v2082, 1.0
        %v2163 = vadd.f32 %v2083, 1.0
        %v2164 = vadd.f32 %v2084, 1.0
        %v2165 = vadd.f32 %v2085, 1.0
        %v2166 = vadd.f32 %v2086, 1.0
        %v2167 = vadd.f32 %v2087, 1.0
        %v2168 = vadd.f32 %v2088, 1.0
        %v2169 = vadd.f32 %v2089, 1.0
        %v2170 = vadd.f32 %v2090, 1.0
        %v2171 = vadd.f32 %v2091, 1.0
        %v2172 = vmul.f32 %v2156, 7.0
        %v2173 = vmul.f32 %v2157, 7.0
        %v2174 = vmul.f32 %v2158, 7.0
        %v2175 = vmul.f32 %v2159, 7.0
        %v2176 = vmul.f32 %v2160, 7.0
        %v2177 = vmul.f32 %v2161, 7.0
        %v2178 = vmul.f32 %v2162, 7.0
        %v2179 = vmul.f32 %v2163, 7.0
        %v2180 = vmul.f32 %v2164, 7.0
        %v2181 = vmul.f32 %v2165, 7.0
        %v2182 = vmul.f32 %v2166, 7.0
        %v2183 = vmul.f32 %v2167, 7.0
        %v2184 = vmul.f32 %v2168, 7.0
        %v2185 = vmul.f32 %v2169, 7.0
        %v2186 = vmul.f32 %v2170, 7.0
        %v2187 = vmul.f32 %v2171, 7.0
        %v2188 = vadd.f32 %v2140, 1.0
        %v2189 = vadd.f32 %v2141, 1.0
        %v2190 = vadd.f32 %v2142, 1.0
        %v2191 = vadd.f32 %v2143, 1.0
        %v2192 = vadd.f32 %v2144, 1.0
        %v2193 = vadd.f32 %v2145, 1.0
        %v2194 = vadd.f32 %v2146, 1.0
        %v2195 = vadd.f32 %v2147, 1.0
        %v2196 = vadd.f32 %v2148, 1.0
        %v2197 = vadd.f32 %v2149, 1.0
        %v2198 = vadd.f32 %v2150, 1.0
        %v2199 = vadd.f32 %v2151, 1.0
        %v2200 = vadd.f32 %v2152, 1.0
        %v2201 = vadd.f32 %v2153, 1.0
        %v2202 = vadd.f32 %v2154, 1.0
        %v2203 = vadd.f32 %v2155, 1.0
        %v2204 = vmul.f32 %v2188, 9.0
        %v2205 = vmul.f32 %v2189, 9.0
        %v2206 = vmul.f32 %v2190, 9.0
        %v2207 = vmul.f32 %v2191, 9.0
        %v2208 = vmul.f32 %v2192, 9.0
        %v2209 = vmul.f32 %v2193, 9.0
        %v2210 = vmul.f32 %v2194, 9.0
        %v2211 = vmul.f32 %v2195, 9.0
        %v2212 = vmul.f32 %v2196, 9.0
        %v2213 = vmul.f32 %v2197, 9.0
        %v2214 = vmul.f32 %v2198, 9.0
        %v2215 = vmul.f32 %v2199, 9.0
        %v2216 = vmul.f32 %v2200, 9.0
        %v2217 = vmul.f32 %v2201, 9.0
        %v2218 = vmul.f32 %v2202, 9.0
        %v2219 = vmul.f32 %v2203, 9.0
        %v2220 = vlaneseq
        %v2221 = vand.u32 %v2220, 127
        %vm2222 = vcmp.eq.s32.totalorder %v2221, 0
        %vm2223 = vcmp.eq.s32.totalorder %v2221, 1
        %vm2224 = vcmp.eq.s32.totalorder %v2221, 2
        %2225 = vset.pattern.permute.xlu0 2
        %2226 = vperm.xlu0 %2225, %v1706
        %v2227 = vpop.permute.xlu0 %2226
        %2229 = vset.pattern.permute.xlu0 2
        %2230 = vperm.xlu0 %2229, %v1721
        %v2231 = vpop.permute.xlu0 %2230
        %2233 = vset.pattern.permute.xlu0 2
        %2234 = vperm.xlu0 %2233, %v1736
        %v2235 = vpop.permute.xlu0 %2234
        %2237 = vset.pattern.permute.xlu0 2
        %2238 = vperm.xlu0 %2237, %v1751
        %v2239 = vpop.permute.xlu0 %2238
        %2241 = vset.pattern.permute.xlu0 2
        %2242 = vperm.xlu0 %2241, %v1766
        %v2243 = vpop.permute.xlu0 %2242
        %2245 = vset.pattern.permute.xlu0 2
        %2246 = vperm.xlu0 %2245, %v1781
        %v2247 = vpop.permute.xlu0 %2246
        %2249 = vset.pattern.permute.xlu0 2
        %2250 = vperm.xlu0 %2249, %v1796
        %v2251 = vpop.permute.xlu0 %2250
        %2253 = vset.pattern.permute.xlu0 2
        %2254 = vperm.xlu0 %2253, %v1811
        %v2255 = vpop.permute.xlu0 %2254
        %2257 = vset.pattern.permute.xlu0 2
        %2258 = vperm.xlu0 %2257, %v1826
        %v2259 = vpop.permute.xlu0 %2258
        %2261 = vset.pattern.permute.xlu0 2
        %2262 = vperm.xlu0 %2261, %v1841
        %v2263 = vpop.permute.xlu0 %2262
        %2265 = vset.pattern.permute.xlu0 2
        %2266 = vperm.xlu0 %2265, %v1856
        %v2267 = vpop.permute.xlu0 %2266
        %2269 = vset.pattern.permute.xlu0 2
        %2270 = vperm.xlu0 %2269, %v1871
        %v2271 = vpop.permute.xlu0 %2270
        %2273 = vset.pattern.permute.xlu0 2
        %2274 = vperm.xlu0 %2273, %v1886
        %v2275 = vpop.permute.xlu0 %2274
        %2277 = vset.pattern.permute.xlu0 2
        %2278 = vperm.xlu0 %2277, %v1901
        %v2279 = vpop.permute.xlu0 %2278
        %2281 = vset.pattern.permute.xlu0 2
        %2282 = vperm.xlu0 %2281, %v1916
        %v2283 = vpop.permute.xlu0 %2282
        %2285 = vset.pattern.permute.xlu0 2
        %2286 = vperm.xlu0 %2285, %v1931
        %v2287 = vpop.permute.xlu0 %2286
        %v2289 = vsel %vm2224, %v2227, 0.0
        %v2290 = vsel %vm2224, %v2231, 0.0
        %v2291 = vsel %vm2224, %v2235, 0.0
        %v2292 = vsel %vm2224, %v2239, 0.0
        %v2293 = vsel %vm2224, %v2243, 0.0
        %v2294 = vsel %vm2224, %v2247, 0.0
        %v2295 = vsel %vm2224, %v2251, 0.0
        %v2296 = vsel %vm2224, %v2255, 0.0
        %v2297 = vsel %vm2224, %v2259, 0.0
        %v2298 = vsel %vm2224, %v2263, 0.0
        %v2299 = vsel %vm2224, %v2267, 0.0
        %v2300 = vsel %vm2224, %v2271, 0.0
        %v2301 = vsel %vm2224, %v2275, 0.0
        %v2302 = vsel %vm2224, %v2279, 0.0
        %v2303 = vsel %vm2224, %v2283, 0.0
        %v2304 = vsel %vm2224, %v2287, 0.0
        %2306 = vset.pattern.permute.xlu0 1
        %2307 = vperm.xlu0 %2306, %v2204
        %v2308 = vpop.permute.xlu0 %2307
        %2311 = vset.pattern.permute.xlu0 1
        %2312 = vperm.xlu0 %2311, %v2205
        %v2313 = vpop.permute.xlu0 %2312
        %2316 = vset.pattern.permute.xlu0 1
        %2317 = vperm.xlu0 %2316, %v2206
        %v2318 = vpop.permute.xlu0 %2317
        %2321 = vset.pattern.permute.xlu0 1
        %2322 = vperm.xlu0 %2321, %v2207
        %v2323 = vpop.permute.xlu0 %2322
        %2326 = vset.pattern.permute.xlu0 1
        %2327 = vperm.xlu0 %2326, %v2208
        %v2328 = vpop.permute.xlu0 %2327
        %2331 = vset.pattern.permute.xlu0 1
        %2332 = vperm.xlu0 %2331, %v2209
        %v2333 = vpop.permute.xlu0 %2332
        %2336 = vset.pattern.permute.xlu0 1
        %2337 = vperm.xlu0 %2336, %v2210
        %v2338 = vpop.permute.xlu0 %2337
        %2341 = vset.pattern.permute.xlu0 1
        %2342 = vperm.xlu0 %2341, %v2211
        %v2343 = vpop.permute.xlu0 %2342
        %2346 = vset.pattern.permute.xlu0 1
        %2347 = vperm.xlu0 %2346, %v2212
        %v2348 = vpop.permute.xlu0 %2347
        %2351 = vset.pattern.permute.xlu0 1
        %2352 = vperm.xlu0 %2351, %v2213
        %v2353 = vpop.permute.xlu0 %2352
        %2356 = vset.pattern.permute.xlu0 1
        %2357 = vperm.xlu0 %2356, %v2214
        %v2358 = vpop.permute.xlu0 %2357
        %2361 = vset.pattern.permute.xlu0 1
        %2362 = vperm.xlu0 %2361, %v2215
        %v2363 = vpop.permute.xlu0 %2362
        %2366 = vset.pattern.permute.xlu0 1
        %2367 = vperm.xlu0 %2366, %v2216
        %v2368 = vpop.permute.xlu0 %2367
        %2371 = vset.pattern.permute.xlu0 1
        %2372 = vperm.xlu0 %2371, %v2217
        %v2373 = vpop.permute.xlu0 %2372
        %2376 = vset.pattern.permute.xlu0 1
        %2377 = vperm.xlu0 %2376, %v2218
        %v2378 = vpop.permute.xlu0 %2377
        %2381 = vset.pattern.permute.xlu0 1
        %2382 = vperm.xlu0 %2381, %v2219
        %v2383 = vpop.permute.xlu0 %2382
        %v2385 = vsel %vm2223, %v2308, %v2289
        %v2386 = vsel %vm2223, %v2313, %v2290
        %v2387 = vsel %vm2223, %v2318, %v2291
        %v2388 = vsel %vm2223, %v2323, %v2292
        %v2389 = vsel %vm2223, %v2328, %v2293
        %v2390 = vsel %vm2223, %v2333, %v2294
        %v2391 = vsel %vm2223, %v2338, %v2295
        %v2392 = vsel %vm2223, %v2343, %v2296
        %v2393 = vsel %vm2223, %v2348, %v2297
        %v2394 = vsel %vm2223, %v2353, %v2298
        %v2395 = vsel %vm2223, %v2358, %v2299
        %v2396 = vsel %vm2223, %v2363, %v2300
        %v2397 = vsel %vm2223, %v2368, %v2301
        %v2398 = vsel %vm2223, %v2373, %v2302
        %v2399 = vsel %vm2223, %v2378, %v2303
        %v2400 = vsel %vm2223, %v2383, %v2304
        %2402 = vset.pattern.permute.xlu0 0
        %2403 = vperm.xlu0 %2402, %v2172
        %v2404 = vpop.permute.xlu0 %2403
        %2407 = vset.pattern.permute.xlu0 0
        %2408 = vperm.xlu0 %2407, %v2173
        %v2409 = vpop.permute.xlu0 %2408
        %2412 = vset.pattern.permute.xlu0 0
        %2413 = vperm.xlu0 %2412, %v2174
        %v2414 = vpop.permute.xlu0 %2413
        %2417 = vset.pattern.permute.xlu0 0
        %2418 = vperm.xlu0 %2417, %v2175
        %v2419 = vpop.permute.xlu0 %2418
        %2422 = vset.pattern.permute.xlu0 0
        %2423 = vperm.xlu0 %2422, %v2176
        %v2424 = vpop.permute.xlu0 %2423
        %2427 = vset.pattern.permute.xlu0 0
        %2428 = vperm.xlu0 %2427, %v2177
        %v2429 = vpop.permute.xlu0 %2428
        %2432 = vset.pattern.permute.xlu0 0
        %2433 = vperm.xlu0 %2432, %v2178
        %v2434 = vpop.permute.xlu0 %2433
        %2437 = vset.pattern.permute.xlu0 0
        %2438 = vperm.xlu0 %2437, %v2179
        %v2439 = vpop.permute.xlu0 %2438
        %2442 = vset.pattern.permute.xlu0 0
        %2443 = vperm.xlu0 %2442, %v2180
        %v2444 = vpop.permute.xlu0 %2443
        %2447 = vset.pattern.permute.xlu0 0
        %2448 = vperm.xlu0 %2447, %v2181
        %v2449 = vpop.permute.xlu0 %2448
        %2452 = vset.pattern.permute.xlu0 0
        %2453 = vperm.xlu0 %2452, %v2182
        %v2454 = vpop.permute.xlu0 %2453
        %2457 = vset.pattern.permute.xlu0 0
        %2458 = vperm.xlu0 %2457, %v2183
        %v2459 = vpop.permute.xlu0 %2458
        %2462 = vset.pattern.permute.xlu0 0
        %2463 = vperm.xlu0 %2462, %v2184
        %v2464 = vpop.permute.xlu0 %2463
        %2467 = vset.pattern.permute.xlu0 0
        %2468 = vperm.xlu0 %2467, %v2185
        %v2469 = vpop.permute.xlu0 %2468
        %2472 = vset.pattern.permute.xlu0 0
        %2473 = vperm.xlu0 %2472, %v2186
        %v2474 = vpop.permute.xlu0 %2473
        %2477 = vset.pattern.permute.xlu0 0
        %2478 = vperm.xlu0 %2477, %v2187
        %v2479 = vpop.permute.xlu0 %2478
        %v2481 = vsel %vm2222, %v2404, %v2385
        %v2482 = vsel %vm2222, %v2409, %v2386
        %v2483 = vsel %vm2222, %v2414, %v2387
        %v2484 = vsel %vm2222, %v2419, %v2388
        %v2485 = vsel %vm2222, %v2424, %v2389
        %v2486 = vsel %vm2222, %v2429, %v2390
        %v2487 = vsel %vm2222, %v2434, %v2391
        %v2488 = vsel %vm2222, %v2439, %v2392
        %v2489 = vsel %vm2222, %v2444, %v2393
        %v2490 = vsel %vm2222, %v2449, %v2394
        %v2491 = vsel %vm2222, %v2454, %v2395
        %v2492 = vsel %vm2222, %v2459, %v2396
        %v2493 = vsel %vm2222, %v2464, %v2397
        %v2494 = vsel %vm2222, %v2469, %v2398
        %v2495 = vsel %vm2222, %v2474, %v2399
        %v2496 = vsel %vm2222, %v2479, %v2400
        %2497 = vst.msk [vmem:[%s377] sm:$0xff] %vm806, %v2481
        %2498 = vst.msk [vmem:[%s377 + $0x8] sm:$0xff] %vm806, %v2482
        %2499 = vst.msk [vmem:[%s377 + $0x10] sm:$0xff] %vm806, %v2483
        %2500 = vst.msk [vmem:[%s377 + $0x18] sm:$0xff] %vm806, %v2484
        %2501 = vst.msk [vmem:[%s377 + $0x20] sm:$0xff] %vm806, %v2485
        %2502 = vst.msk [vmem:[%s377 + $0x28] sm:$0xff] %vm806, %v2486
        %2503 = vst.msk [vmem:[%s377 + $0x30] sm:$0xff] %vm806, %v2487
        %2504 = vst.msk [vmem:[%s377 + $0x38] sm:$0xff] %vm806, %v2488
        %2505 = vst.msk [vmem:[%s377 + $0x40] sm:$0xff] %vm806, %v2489
        %2506 = vst.msk [vmem:[%s377 + $0x48] sm:$0xff] %vm806, %v2490
        %2507 = vst.msk [vmem:[%s377 + $0x50] sm:$0xff] %vm806, %v2491
        %2508 = vst.msk [vmem:[%s377 + $0x58] sm:$0xff] %vm806, %v2492
        %2509 = vst.msk [vmem:[%s377 + $0x60] sm:$0xff] %vm806, %v2493
        %2510 = vst.msk [vmem:[%s377 + $0x68] sm:$0xff] %vm806, %v2494
        %2511 = vst.msk [vmem:[%s377 + $0x70] sm:$0xff] %vm806, %v2495
        %2512 = vst.msk [vmem:[%s377 + $0x78] sm:$0xff] %vm806, %v2496
      $region60: #{tpu_custom_call.1} parent=51 // pred_fallthru
        _
      %s2513 = smul.u32 16, %s23
      %p2514 = scmp.lt.s32.totalorder %s2513, 31
      %s2515 = scalar_select %p2514, %s2513, 31
      %s2516 = smul.addr %s2515, 8
      %s2517 = scalar_lea.vmem %s8, %s2516
      // Predicated region
      $region61: #{tpu_custom_call.1} parent=51 // pred_check
        %p2518 = pneg %p237
      $region62: #{tpu_custom_call.1} parent=51 // pred_check_branch
        %2520 = sbr.rel (%p2518) target = $region64
      $region63: #{tpu_custom_call.1} parent=51 // pred_region
        %s2521 = smul.u32 16, %s23
      $region64: #{tpu_custom_call.1} parent=51 // pred_fallthru
        _
    $region52: #{tpu_custom_call.1} parent=5 // pred_fallthru
      _
    %p2522 = scmp.le.s32.totalorder 2, %s14
    // Predicated region
    $region65: #{tpu_custom_call.1} parent=5 // pred_check
      %p2523 = pneg %p2522
    $region66: #{tpu_custom_call.1} parent=5 // pred_check_branch
      %2525 = sbr.rel (%p2523) target = $region68
    $region67: #{tpu_custom_call.1} parent=5 // pred_region
      %s2526 = ssub.s32 %s14, 2
      // Predicated region
      $region69: #{tpu_custom_call.1} parent=67 // pred_check
        %p2527 = pneg %p243
      $region70: #{tpu_custom_call.1} parent=67 // pred_check_branch
        %2529 = sbr.rel (%p2527) target = $region72
      $region71: #{tpu_custom_call.1} parent=67 // pred_region
        %s2530 = smul.u32 16, %s25
        %p2531 = scmp.lt.s32.totalorder %s2530, 31
        %s2532 = scalar_select %p2531, %s2530, 31
        %s2533 = smul.addr %s2532, 8
        %s2534 = scalar_lea.vmem %s8, %s2533
      $region72: #{tpu_custom_call.1} parent=67 // pred_fallthru
        _
    $region68: #{tpu_custom_call.1} parent=5 // pred_fallthru
      _
  $region6: #{tpu_custom_call.1} parent=0 // loop_footer
    %s18 = sadd.s32 1, %s14
  $region7: #{tpu_custom_call.1} parent=0 // loop_footer_branch
    %13 = sbr.rel target = $region3
  $region8: #{tpu_custom_call.1} parent=0 // loop_exit
    _

</llo_original>
